<compile_context>
chip_gen: v7x
topology: tpu7x:2x2x1
jax: 0.10.0
libtpu: 0.0.40
codegen_flags: <defaults>
</compile_context>

<pallas_src>
import functools

import jax
import jax.numpy as jnp
import numpy as np
from jax.experimental import pallas as pl
from jax.experimental.pallas import tpu as pltpu

BN_EPS = 1e-5


# --------------------------- fused block kernel ------------------------------

def _block_kernel(*refs, stride, H, W, Ho, Wo, has_down):
    """One whole RobustResNet bottleneck block for a single batch element.

    refs = (x, w1, ss1, wdw9, ss2, w2, ss3, [wdown, ssd], out, y_pad_scratch)
      x    : (1, H, W, Cin)          input block (NHWC)
      w1   : (Cin, dim)              1x1 conv weights
      ss*  : (2, C)                  row0 = folded-BN scale, row1 = shift
      wdw9 : (9, dim)                depthwise taps, row = 3*di + dj
      w2   : (dim, Cout)
      wdown: (Cin, Cout)             downsample 1x1 conv (optional)
      out  : (1, Ho*Wo, Cout)
      y_pad: (H+2, W+2, dim)         VMEM scratch (halo for the depthwise)
    """
    if has_down:
        (x_ref, w1_ref, ss1_ref, wdw_ref, ss2_ref, w2_ref, ss3_ref,
         wd_ref, ssd_ref, o_ref, y_pad) = refs
    else:
        (x_ref, w1_ref, ss1_ref, wdw_ref, ss2_ref, w2_ref, ss3_ref,
         o_ref, y_pad) = refs
        wd_ref = ssd_ref = None

    Cin = x_ref.shape[-1]
    dim = w1_ref.shape[-1]
    Cout = w2_ref.shape[-1]
    s = stride

    # ---- conv1: 1x1 (Cin -> dim) as MXU matmul + folded BN + ReLU ----------
    x3 = x_ref[0]                                        # (H, W, Cin)
    x2d = x3.reshape(H * W, Cin)
    y2d = jnp.dot(x2d, w1_ref[...], preferred_element_type=jnp.float32)
    y2d = jnp.maximum(y2d * ss1_ref[0:1, :] + ss1_ref[1:2, :], 0.0)

    # stash y into a zero-padded VMEM halo scratch (no HBM round trip).
    # (full zeroing kept for simplicity; border-only zeroing is a micro-opt)
    y_pad[...] = jnp.zeros((H + 2, W + 2, dim), jnp.float32)
    y_pad[1:H + 1, 1:W + 1, :] = y2d.reshape(H, W, dim)

    # ---- depthwise 3x3 at the block stride + folded BN + ReLU --------------
    # strided taps read directly from the scratch ref (no stride-1 waste,
    # no subsample copy); acc starts from the first tap (no zeros init).
    acc = None
    for di in range(3):
        ih = pl.ds(di, Ho, s) if s > 1 else pl.ds(di, Ho)
        for dj in range(3):
            iw = pl.ds(dj, Wo, s) if s > 1 else pl.ds(dj, Wo)
            v = y_pad[ih, iw, :]                         # (Ho, Wo, dim)
            k = 3 * di + dj
            t = v * wdw_ref[k:k + 1, :]                  # (1, dim) broadcast
            acc = t if acc is None else acc + t
    z = jnp.maximum(acc * ss2_ref[0:1, :] + ss2_ref[1:2, :], 0.0)

    # ---- conv2: 1x1 (dim -> Cout) + folded BN + layer-scale ----------------
    z2d = z.reshape(Ho * Wo, dim)
    main = jnp.dot(z2d, w2_ref[...], preferred_element_type=jnp.float32)
    main = main * ss3_ref[0:1, :] + ss3_ref[1:2, :]      # layer-scale folded in

    # ---- shortcut: fused downsample 1x1(stride) + BN, or identity ----------
    if has_down:
        if s > 1:
            sc4 = x_ref[:, pl.ds(0, Ho, s), pl.ds(0, Wo, s), :]  # (1,Ho,Wo,Cin)
        else:
            sc4 = x_ref[...]
        sc = jnp.dot(sc4.reshape(Ho * Wo, Cin), wd_ref[...],
                     preferred_element_type=jnp.float32)
        sc = sc * ssd_ref[0:1, :] + ssd_ref[1:2, :]
    else:
        sc = x3.reshape(Ho * Wo, Cout)

    o_ref[0] = jnp.maximum(main + sc, 0.0).astype(o_ref.dtype)


# --------------------------- glue (plain JAX) --------------------------------

def fold_bn(conv_bias, bn):
    """Fold eval-mode BatchNorm (+ preceding conv bias) into per-channel
    scale/shift applied after the conv matmul."""
    s = bn["gamma"] / jnp.sqrt(bn["var"] + BN_EPS)
    sh = (conv_bias - bn["mean"]) * s + bn["beta"]
    return s, sh


def block_forward(x_nhwc, p):
    N, H, W, Cin = x_nhwc.shape
    s = p["stride"]
    Ho = (H - 1) // s + 1
    Wo = (W - 1) // s + 1
    dim = p["w1"].shape[1]
    Cout = p["w2"].shape[1]
    has_down = p.get("down") is not None
    if not has_down:
        # identity shortcut is only shape-correct when Stage guarantees it
        assert s == 1 and Cin == Cout, (s, Cin, Cout)

    s1, sh1 = fold_bn(p["b1"], p["bn1"])
    s2, sh2 = fold_bn(p["bdw"], p["bn2"])
    s3, sh3 = fold_bn(p["b2"], p["bn3"])
    g = p["ls_gamma"]
    ss1 = jnp.stack([s1, sh1])             # (2, dim)
    ss2 = jnp.stack([s2, sh2])             # (2, dim)
    ss3 = jnp.stack([s3 * g, sh3 * g])     # (2, Cout), layer-scale folded in
    wdw9 = p["wdw"].reshape(9, dim)

    args = [x_nhwc, p["w1"], ss1, wdw9, ss2, p["w2"], ss3]
    in_specs = [
        pl.BlockSpec((1, H, W, Cin), lambda n: (n, 0, 0, 0)),
        pl.BlockSpec((Cin, dim), lambda n: (0, 0)),
        pl.BlockSpec((2, dim), lambda n: (0, 0)),
        pl.BlockSpec((9, dim), lambda n: (0, 0)),
        pl.BlockSpec((2, dim), lambda n: (0, 0)),
        pl.BlockSpec((dim, Cout), lambda n: (0, 0)),
        pl.BlockSpec((2, Cout), lambda n: (0, 0)),
    ]
    if has_down:
        d = p["down"]
        sd, shd = fold_bn(d["b"], d["bn"])
        args += [d["w"], jnp.stack([sd, shd])]
        in_specs += [
            pl.BlockSpec((Cin, Cout), lambda n: (0, 0)),
            pl.BlockSpec((2, Cout), lambda n: (0, 0)),
        ]

    kernel = functools.partial(_block_kernel, stride=s, H=H, W=W,
                               Ho=Ho, Wo=Wo, has_down=has_down)
    out = pl.pallas_call(
        kernel,
        out_shape=jax.ShapeDtypeStruct((N, Ho * Wo, Cout), jnp.float32),
        grid=(N,),
        in_specs=in_specs,
        out_specs=pl.BlockSpec((1, Ho * Wo, Cout), lambda n: (n, 0, 0)),
        scratch_shapes=[pltpu.VMEM((H + 2, W + 2, dim), jnp.float32)],
        compiler_params=pltpu.CompilerParams(
            dimension_semantics=("parallel",)),
    )(*args)
    return out.reshape(N, Ho, Wo, Cout)


def stage_forward(x_nchw, stage_params):
    x = jnp.transpose(x_nchw, (0, 2, 3, 1))  # NCHW -> NHWC
    for p in stage_params:
        x = block_forward(x, p)
    return jnp.transpose(x, (0, 3, 1, 2))    # NHWC -> NCHW


# --------------------------- deterministic params ---------------------------

def init_bn(key, c):
    k1, k2, k3, k4 = jax.random.split(key, 4)
    return dict(
        gamma=1.0 + 0.1 * jax.random.normal(k1, (c,), jnp.float32),
        beta=0.1 * jax.random.normal(k2, (c,), jnp.float32),
        mean=0.1 * jax.random.normal(k3, (c,), jnp.float32),
        var=1.0 + 0.1 * jax.nn.softplus(jax.random.normal(k4, (c,), jnp.float32)),
    )


def init_stage(key, in_chs, chs, stride=2, depth=2, mlp_ratio=4.0,
               layer_scale_init_value=1.0):
    out_chs = int(mlp_ratio * chs)
    blocks = []
    cur_in = in_chs
    for block_idx in range(depth):
        cur_stride = stride if block_idx == 0 else 1      # stride_block_idx = 0
        key, kw1, kb1, kbn1, kdw, kbdw, kbn2, kw2, kb2, kbn3, kdn = \
            jax.random.split(key, 11)
        dim = chs
        p = dict(
            stride=cur_stride,
            w1=0.2 * jax.random.normal(kw1, (cur_in, dim), jnp.float32),
            b1=0.1 * jax.random.normal(kb1, (dim,), jnp.float32),
            bn1=init_bn(kbn1, dim),
            wdw=0.2 * jax.random.normal(kdw, (3, 3, dim), jnp.float32),
            bdw=0.1 * jax.random.normal(kbdw, (dim,), jnp.float32),
            bn2=init_bn(kbn2, dim),
            w2=0.2 * jax.random.normal(kw2, (dim, out_chs), jnp.float32),
            b2=0.1 * jax.random.normal(kb2, (out_chs,), jnp.float32),
            bn3=init_bn(kbn3, out_chs),
            ls_gamma=layer_scale_init_value * jnp.ones((out_chs,), jnp.float32),
            down=None,
        )
        if cur_in != out_chs or cur_stride > 1:
            # downsample_conv with down_kernel_size=1 -> 1x1 conv(stride) + BN
            kdw_, kdb_, kdbn_ = jax.random.split(kdn, 3)
            p["down"] = dict(
                w=0.2 * jax.random.normal(kdw_, (cur_in, out_chs), jnp.float32),
                b=0.1 * jax.random.normal(kdb_, (out_chs,), jnp.float32),
                bn=init_bn(kdbn_, out_chs),
            )
        blocks.append(p)
        cur_in = out_chs
    return blocks


# --------------------------- pure-JAX reference ------------------------------

def _ref_bn(y, bn):
    return (y - bn["mean"]) / jnp.sqrt(bn["var"] + BN_EPS) * bn["gamma"] + bn["beta"]


def _ref_pw(x, w, b, stride=1):
    if stride > 1:
        x = x[:, ::stride, ::stride, :]
    return jnp.einsum("nhwc,cd->nhwd", x, w) + b


def _ref_dw(x, w, b, stride):
    C = x.shape[-1]
    y = jax.lax.conv_general_dilated(
        x, w.reshape(3, 3, 1, C), (stride, stride), ((1, 1), (1, 1)),
        dimension_numbers=("NHWC", "HWIO", "NHWC"), feature_group_count=C)
    return y + b


def ref_stage(x_nchw, stage_params):
    x = jnp.transpose(x_nchw, (0, 2, 3, 1))
    for p in stage_params:
        s = p["stride"]
        sc = x
        y = jax.nn.relu(_ref_bn(_ref_pw(x, p["w1"], p["b1"]), p["bn1"]))
        y = jax.nn.relu(_ref_bn(_ref_dw(y, p["wdw"], p["bdw"], s), p["bn2"]))
        y = _ref_bn(_ref_pw(y, p["w2"], p["b2"]), p["bn3"]) * p["ls_gamma"]
        if p["down"] is not None:
            sc = _ref_bn(_ref_pw(sc, p["down"]["w"], p["down"]["b"], stride=s),
                         p["down"]["bn"])
        x = jax.nn.relu(y + sc)
    return jnp.transpose(x, (0, 3, 1, 2))


# --------------------------------- main --------------------------------------

if __name__ == "__main__":
    key = jax.random.PRNGKey(0)
    kx, kp = jax.random.split(key)

    # small shapes consistent with the module: Stage(in_chs=16, chs=8, stride=2,
    # depth=2, mlp_ratio=4) on an NCHW input (2, 16, 16, 16) -> (2, 32, 8, 8)
    N, in_chs, H, W = 2, 16, 16, 16
    chs, stride, depth, mlp_ratio = 8, 2, 2, 4.0

    x = jax.random.normal(kx, (N, in_chs, H, W), jnp.float32)
    params = init_stage(kp, in_chs, chs, stride=stride, depth=depth,
                        mlp_ratio=mlp_ratio, layer_scale_init_value=1.0)

    out = jax.block_until_ready(stage_forward(x, params))
    ref = jax.block_until_ready(ref_stage(x, params))

    assert out.shape == (N, int(mlp_ratio * chs), H // stride, W // stride), out.shape
    np.testing.assert_allclose(np.asarray(out), np.asarray(ref),
                               rtol=5e-3, atol=5e-3)
    print("KERNEL_OK")
</pallas_src>

<mosaic_0001>
module attributes {stable_mosaic.version = 11 : i64} {
  func.func @_block_kernel(%arg0: i32, %arg1: memref<1x16x16x16xf32, #tpu.memory_space<vmem>>, %arg2: memref<16x8xf32, #tpu.memory_space<vmem>>, %arg3: memref<2x8xf32, #tpu.memory_space<vmem>>, %arg4: memref<9x8xf32, #tpu.memory_space<vmem>>, %arg5: memref<2x8xf32, #tpu.memory_space<vmem>>, %arg6: memref<8x32xf32, #tpu.memory_space<vmem>>, %arg7: memref<2x32xf32, #tpu.memory_space<vmem>>, %arg8: memref<16x32xf32, #tpu.memory_space<vmem>>, %arg9: memref<2x32xf32, #tpu.memory_space<vmem>>, %arg10: memref<1x64x32xf32, #tpu.memory_space<vmem>>, %arg11: memref<18x18x8xf32, #tpu.memory_space<vmem>>) attributes {dimension_semantics = [#tpu.dimension_semantics<parallel>], iteration_bounds = array<i64: 2>, scalar_prefetch = 0 : i64, scratch_operands = 1 : i64, tpu.core_type = #tpu.core_type<tc>, window_params = [{transform_indices = @transform_0, window_bounds = array<i64: 1, 16, 16, 16>}, {pipeline_mode = #tpu.pipeline_mode<synchronous>, transform_indices = @transform_1, window_bounds = array<i64: 16, 8>}, {pipeline_mode = #tpu.pipeline_mode<synchronous>, transform_indices = @transform_2, window_bounds = array<i64: 2, 8>}, {pipeline_mode = #tpu.pipeline_mode<synchronous>, transform_indices = @transform_3, window_bounds = array<i64: 9, 8>}, {pipeline_mode = #tpu.pipeline_mode<synchronous>, transform_indices = @transform_4, window_bounds = array<i64: 2, 8>}, {pipeline_mode = #tpu.pipeline_mode<synchronous>, transform_indices = @transform_5, window_bounds = array<i64: 8, 32>}, {pipeline_mode = #tpu.pipeline_mode<synchronous>, transform_indices = @transform_6, window_bounds = array<i64: 2, 32>}, {pipeline_mode = #tpu.pipeline_mode<synchronous>, transform_indices = @transform_7, window_bounds = array<i64: 16, 32>}, {pipeline_mode = #tpu.pipeline_mode<synchronous>, transform_indices = @transform_8, window_bounds = array<i64: 2, 32>}, {transform_indices = @transform_9, window_bounds = array<i64: 1, 64, 32>}]} {
    %c0 = arith.constant 0 : index
    %c0_0 = arith.constant 0 : index
    %c0_1 = arith.constant 0 : index
    %c0_2 = arith.constant 0 : index
    %0 = vector.load %arg1[%c0, %c0_0, %c0_1, %c0_2] : memref<1x16x16x16xf32, #tpu.memory_space<vmem>>, vector<1x16x16x16xf32>
    %1 = vector.shape_cast %0 : vector<1x16x16x16xf32> to vector<16x16x16xf32>
    %2 = vector.shape_cast %1 : vector<16x16x16xf32> to vector<256x16xf32>
    %c0_3 = arith.constant 0 : index
    %c0_4 = arith.constant 0 : index
    %3 = vector.load %arg2[%c0_3, %c0_4] : memref<16x8xf32, #tpu.memory_space<vmem>>, vector<16x8xf32>
    %cst = arith.constant dense<0.000000e+00> : vector<256x8xf32>
    %4 = tpu.matmul %2, %3, %cst {dimension_numbers = #tpu.dot_dimension_numbers<[1], [0], [0], [1], [0, 0, 1, 1], [], []>} : vector<256x16xf32>, vector<16x8xf32>, vector<256x8xf32> -> vector<256x8xf32>
    %c0_5 = arith.constant 0 : index
    %c0_6 = arith.constant 0 : index
    %5 = vector.load %arg3[%c0_5, %c0_6] : memref<2x8xf32, #tpu.memory_space<vmem>>, vector<1x8xf32>
    %6 = vector.broadcast %5 : vector<1x8xf32> to vector<256x8xf32>
    %7 = arith.mulf %4, %6 : vector<256x8xf32>
    %c1 = arith.constant 1 : index
    %c0_7 = arith.constant 0 : index
    %8 = vector.load %arg3[%c1, %c0_7] : memref<2x8xf32, #tpu.memory_space<vmem>>, vector<1x8xf32>
    %9 = vector.broadcast %8 : vector<1x8xf32> to vector<256x8xf32>
    %10 = arith.addf %7, %9 : vector<256x8xf32>
    %cst_8 = arith.constant 0.000000e+00 : f32
    %11 = vector.broadcast %cst_8 : f32 to vector<256x8xf32>
    %12 = arith.maximumf %10, %11 : vector<256x8xf32>
    %cst_9 = arith.constant 0.000000e+00 : f32
    %13 = vector.broadcast %cst_9 : f32 to vector<18x18x8xf32>
    %c0_10 = arith.constant 0 : index
    %c0_11 = arith.constant 0 : index
    %c0_12 = arith.constant 0 : index
    %14 = vector.load %arg11[%c0_10, %c0_11, %c0_12] : memref<18x18x8xf32, #tpu.memory_space<vmem>>, vector<18x18x8xf32>
    tpu.vector_store %arg11[%c0_10, %c0_11, %c0_12], %13 {strides = array<i32>} : memref<18x18x8xf32, #tpu.memory_space<vmem>>, vector<18x18x8xf32>,
    %15 = vector.shape_cast %12 : vector<256x8xf32> to vector<16x16x8xf32>
    %c1_13 = arith.constant 1 : index
    %c1_14 = arith.constant 1 : index
    %c0_15 = arith.constant 0 : index
    %16 = vector.load %arg11[%c1_13, %c1_14, %c0_15] : memref<18x18x8xf32, #tpu.memory_space<vmem>>, vector<16x16x8xf32>
    tpu.vector_store %arg11[%c1_13, %c1_14, %c0_15], %15 {strides = array<i32>} : memref<18x18x8xf32, #tpu.memory_space<vmem>>, vector<16x16x8xf32>,
    %c0_16 = arith.constant 0 : index
    %c0_17 = arith.constant 0 : index
    %c0_18 = arith.constant 0 : index
    %17 = tpu.strided_load %arg11[%c0_16, %c0_17, %c0_18] {strides = array<i32: 2, 2, 1>} : memref<18x18x8xf32, #tpu.memory_space<vmem>>, vector<8x8x8xf32>
    %c0_19 = arith.constant 0 : index
    %c0_20 = arith.constant 0 : index
    %18 = vector.load %arg4[%c0_19, %c0_20] : memref<9x8xf32, #tpu.memory_space<vmem>>, vector<1x8xf32>
    %19 = vector.shape_cast %18 : vector<1x8xf32> to vector<1x1x8xf32>
    %20 = vector.broadcast %19 : vector<1x1x8xf32> to vector<8x8x8xf32>
    %21 = arith.mulf %17, %20 : vector<8x8x8xf32>
    %c0_21 = arith.constant 0 : index
    %c1_22 = arith.constant 1 : index
    %c0_23 = arith.constant 0 : index
    %22 = tpu.strided_load %arg11[%c0_21, %c1_22, %c0_23] {strides = array<i32: 2, 2, 1>} : memref<18x18x8xf32, #tpu.memory_space<vmem>>, vector<8x8x8xf32>
    %c1_24 = arith.constant 1 : index
    %c0_25 = arith.constant 0 : index
    %23 = vector.load %arg4[%c1_24, %c0_25] : memref<9x8xf32, #tpu.memory_space<vmem>>, vector<1x8xf32>
    %24 = vector.shape_cast %23 : vector<1x8xf32> to vector<1x1x8xf32>
    %25 = vector.broadcast %24 : vector<1x1x8xf32> to vector<8x8x8xf32>
    %26 = arith.mulf %22, %25 : vector<8x8x8xf32>
    %27 = arith.addf %21, %26 : vector<8x8x8xf32>
    %c0_26 = arith.constant 0 : index
    %c2 = arith.constant 2 : index
    %c0_27 = arith.constant 0 : index
    %28 = tpu.strided_load %arg11[%c0_26, %c2, %c0_27] {strides = array<i32: 2, 2, 1>} : memref<18x18x8xf32, #tpu.memory_space<vmem>>, vector<8x8x8xf32>
    %c2_28 = arith.constant 2 : index
    %c0_29 = arith.constant 0 : index
    %29 = vector.load %arg4[%c2_28, %c0_29] : memref<9x8xf32, #tpu.memory_space<vmem>>, vector<1x8xf32>
    %30 = vector.shape_cast %29 : vector<1x8xf32> to vector<1x1x8xf32>
    %31 = vector.broadcast %30 : vector<1x1x8xf32> to vector<8x8x8xf32>
    %32 = arith.mulf %28, %31 : vector<8x8x8xf32>
    %33 = arith.addf %27, %32 : vector<8x8x8xf32>
    %c1_30 = arith.constant 1 : index
    %c0_31 = arith.constant 0 : index
    %c0_32 = arith.constant 0 : index
    %34 = tpu.strided_load %arg11[%c1_30, %c0_31, %c0_32] {strides = array<i32: 2, 2, 1>} : memref<18x18x8xf32, #tpu.memory_space<vmem>>, vector<8x8x8xf32>
    %c3 = arith.constant 3 : index
    %c0_33 = arith.constant 0 : index
    %35 = vector.load %arg4[%c3, %c0_33] : memref<9x8xf32, #tpu.memory_space<vmem>>, vector<1x8xf32>
    %36 = vector.shape_cast %35 : vector<1x8xf32> to vector<1x1x8xf32>
    %37 = vector.broadcast %36 : vector<1x1x8xf32> to vector<8x8x8xf32>
    %38 = arith.mulf %34, %37 : vector<8x8x8xf32>
    %39 = arith.addf %33, %38 : vector<8x8x8xf32>
    %c1_34 = arith.constant 1 : index
    %c1_35 = arith.constant 1 : index
    %c0_36 = arith.constant 0 : index
    %40 = tpu.strided_load %arg11[%c1_34, %c1_35, %c0_36] {strides = array<i32: 2, 2, 1>} : memref<18x18x8xf32, #tpu.memory_space<vmem>>, vector<8x8x8xf32>
    %c4 = arith.constant 4 : index
    %c0_37 = arith.constant 0 : index
    %41 = vector.load %arg4[%c4, %c0_37] : memref<9x8xf32, #tpu.memory_space<vmem>>, vector<1x8xf32>
    %42 = vector.shape_cast %41 : vector<1x8xf32> to vector<1x1x8xf32>
    %43 = vector.broadcast %42 : vector<1x1x8xf32> to vector<8x8x8xf32>
    %44 = arith.mulf %40, %43 : vector<8x8x8xf32>
    %45 = arith.addf %39, %44 : vector<8x8x8xf32>
    %c1_38 = arith.constant 1 : index
    %c2_39 = arith.constant 2 : index
    %c0_40 = arith.constant 0 : index
    %46 = tpu.strided_load %arg11[%c1_38, %c2_39, %c0_40] {strides = array<i32: 2, 2, 1>} : memref<18x18x8xf32, #tpu.memory_space<vmem>>, vector<8x8x8xf32>
    %c5 = arith.constant 5 : index
    %c0_41 = arith.constant 0 : index
    %47 = vector.load %arg4[%c5, %c0_41] : memref<9x8xf32, #tpu.memory_space<vmem>>, vector<1x8xf32>
    %48 = vector.shape_cast %47 : vector<1x8xf32> to vector<1x1x8xf32>
    %49 = vector.broadcast %48 : vector<1x1x8xf32> to vector<8x8x8xf32>
    %50 = arith.mulf %46, %49 : vector<8x8x8xf32>
    %51 = arith.addf %45, %50 : vector<8x8x8xf32>
    %c2_42 = arith.constant 2 : index
    %c0_43 = arith.constant 0 : index
    %c0_44 = arith.constant 0 : index
    %52 = tpu.strided_load %arg11[%c2_42, %c0_43, %c0_44] {strides = array<i32: 2, 2, 1>} : memref<18x18x8xf32, #tpu.memory_space<vmem>>, vector<8x8x8xf32>
    %c6 = arith.constant 6 : index
    %c0_45 = arith.constant 0 : index
    %53 = vector.load %arg4[%c6, %c0_45] : memref<9x8xf32, #tpu.memory_space<vmem>>, vector<1x8xf32>
    %54 = vector.shape_cast %53 : vector<1x8xf32> to vector<1x1x8xf32>
    %55 = vector.broadcast %54 : vector<1x1x8xf32> to vector<8x8x8xf32>
    %56 = arith.mulf %52, %55 : vector<8x8x8xf32>
    %57 = arith.addf %51, %56 : vector<8x8x8xf32>
    %c2_46 = arith.constant 2 : index
    %c1_47 = arith.constant 1 : index
    %c0_48 = arith.constant 0 : index
    %58 = tpu.strided_load %arg11[%c2_46, %c1_47, %c0_48] {strides = array<i32: 2, 2, 1>} : memref<18x18x8xf32, #tpu.memory_space<vmem>>, vector<8x8x8xf32>
    %c7 = arith.constant 7 : index
    %c0_49 = arith.constant 0 : index
    %59 = vector.load %arg4[%c7, %c0_49] : memref<9x8xf32, #tpu.memory_space<vmem>>, vector<1x8xf32>
    %60 = vector.shape_cast %59 : vector<1x8xf32> to vector<1x1x8xf32>
    %61 = vector.broadcast %60 : vector<1x1x8xf32> to vector<8x8x8xf32>
    %62 = arith.mulf %58, %61 : vector<8x8x8xf32>
    %63 = arith.addf %57, %62 : vector<8x8x8xf32>
    %c2_50 = arith.constant 2 : index
    %c2_51 = arith.constant 2 : index
    %c0_52 = arith.constant 0 : index
    %64 = tpu.strided_load %arg11[%c2_50, %c2_51, %c0_52] {strides = array<i32: 2, 2, 1>} : memref<18x18x8xf32, #tpu.memory_space<vmem>>, vector<8x8x8xf32>
    %c8 = arith.constant 8 : index
    %c0_53 = arith.constant 0 : index
    %65 = vector.load %arg4[%c8, %c0_53] : memref<9x8xf32, #tpu.memory_space<vmem>>, vector<1x8xf32>
    %66 = vector.shape_cast %65 : vector<1x8xf32> to vector<1x1x8xf32>
    %67 = vector.broadcast %66 : vector<1x1x8xf32> to vector<8x8x8xf32>
    %68 = arith.mulf %64, %67 : vector<8x8x8xf32>
    %69 = arith.addf %63, %68 : vector<8x8x8xf32>
    %c0_54 = arith.constant 0 : index
    %c0_55 = arith.constant 0 : index
    %70 = vector.load %arg5[%c0_54, %c0_55] : memref<2x8xf32, #tpu.memory_space<vmem>>, vector<1x8xf32>
    %71 = vector.shape_cast %70 : vector<1x8xf32> to vector<1x1x8xf32>
    %72 = vector.broadcast %71 : vector<1x1x8xf32> to vector<8x8x8xf32>
    %73 = arith.mulf %69, %72 : vector<8x8x8xf32>
    %c1_56 = arith.constant 1 : index
    %c0_57 = arith.constant 0 : index
    %74 = vector.load %arg5[%c1_56, %c0_57] : memref<2x8xf32, #tpu.memory_space<vmem>>, vector<1x8xf32>
    %75 = vector.shape_cast %74 : vector<1x8xf32> to vector<1x1x8xf32>
    %76 = vector.broadcast %75 : vector<1x1x8xf32> to vector<8x8x8xf32>
    %77 = arith.addf %73, %76 : vector<8x8x8xf32>
    %cst_58 = arith.constant 0.000000e+00 : f32
    %78 = vector.broadcast %cst_58 : f32 to vector<8x8x8xf32>
    %79 = arith.maximumf %77, %78 : vector<8x8x8xf32>
    %80 = vector.shape_cast %79 : vector<8x8x8xf32> to vector<64x8xf32>
    %c0_59 = arith.constant 0 : index
    %c0_60 = arith.constant 0 : index
    %81 = vector.load %arg6[%c0_59, %c0_60] : memref<8x32xf32, #tpu.memory_space<vmem>>, vector<8x32xf32>
    %cst_61 = arith.constant dense<0.000000e+00> : vector<64x32xf32>
    %82 = tpu.matmul %80, %81, %cst_61 {dimension_numbers = #tpu.dot_dimension_numbers<[1], [0], [0], [1], [0, 0, 1, 1], [], []>} : vector<64x8xf32>, vector<8x32xf32>, vector<64x32xf32> -> vector<64x32xf32>
    %c0_62 = arith.constant 0 : index
    %c0_63 = arith.constant 0 : index
    %83 = vector.load %arg7[%c0_62, %c0_63] : memref<2x32xf32, #tpu.memory_space<vmem>>, vector<1x32xf32>
    %84 = vector.broadcast %83 : vector<1x32xf32> to vector<64x32xf32>
    %85 = arith.mulf %82, %84 : vector<64x32xf32>
    %c1_64 = arith.constant 1 : index
    %c0_65 = arith.constant 0 : index
    %86 = vector.load %arg7[%c1_64, %c0_65] : memref<2x32xf32, #tpu.memory_space<vmem>>, vector<1x32xf32>
    %87 = vector.broadcast %86 : vector<1x32xf32> to vector<64x32xf32>
    %88 = arith.addf %85, %87 : vector<64x32xf32>
    %c0_66 = arith.constant 0 : index
    %c0_67 = arith.constant 0 : index
    %c0_68 = arith.constant 0 : index
    %c0_69 = arith.constant 0 : index
    %89 = tpu.strided_load %arg1[%c0_66, %c0_67, %c0_68, %c0_69] {strides = array<i32: 1, 2, 2, 1>} : memref<1x16x16x16xf32, #tpu.memory_space<vmem>>, vector<1x8x8x16xf32>
    %90 = vector.shape_cast %89 : vector<1x8x8x16xf32> to vector<64x16xf32>
    %c0_70 = arith.constant 0 : index
    %c0_71 = arith.constant 0 : index
    %91 = vector.load %arg8[%c0_70, %c0_71] : memref<16x32xf32, #tpu.memory_space<vmem>>, vector<16x32xf32>
    %cst_72 = arith.constant dense<0.000000e+00> : vector<64x32xf32>
    %92 = tpu.matmul %90, %91, %cst_72 {dimension_numbers = #tpu.dot_dimension_numbers<[1], [0], [0], [1], [0, 0, 1, 1], [], []>} : vector<64x16xf32>, vector<16x32xf32>, vector<64x32xf32> -> vector<64x32xf32>
    %c0_73 = arith.constant 0 : index
    %c0_74 = arith.constant 0 : index
    %93 = vector.load %arg9[%c0_73, %c0_74] : memref<2x32xf32, #tpu.memory_space<vmem>>, vector<1x32xf32>
    %94 = vector.broadcast %93 : vector<1x32xf32> to vector<64x32xf32>
    %95 = arith.mulf %92, %94 : vector<64x32xf32>
    %c1_75 = arith.constant 1 : index
    %c0_76 = arith.constant 0 : index
    %96 = vector.load %arg9[%c1_75, %c0_76] : memref<2x32xf32, #tpu.memory_space<vmem>>, vector<1x32xf32>
    %97 = vector.broadcast %96 : vector<1x32xf32> to vector<64x32xf32>
    %98 = arith.addf %95, %97 : vector<64x32xf32>
    %99 = arith.addf %88, %98 : vector<64x32xf32>
    %cst_77 = arith.constant 0.000000e+00 : f32
    %100 = vector.broadcast %cst_77 : f32 to vector<64x32xf32>
    %101 = arith.maximumf %99, %100 : vector<64x32xf32>
    %c0_78 = arith.constant 0 : index
    %c0_79 = arith.constant 0 : index
    %c0_80 = arith.constant 0 : index
    %102 = vector.load %arg10[%c0_78, %c0_79, %c0_80] : memref<1x64x32xf32, #tpu.memory_space<vmem>>, vector<1x64x32xf32>
    %103 = vector.shape_cast %102 : vector<1x64x32xf32> to vector<64x32xf32>
    %104 = vector.shape_cast %101 : vector<64x32xf32> to vector<1x64x32xf32>
    tpu.vector_store %arg10[%c0_78, %c0_79, %c0_80], %104 {strides = array<i32>} : memref<1x64x32xf32, #tpu.memory_space<vmem>>, vector<1x64x32xf32>,
    return
  }
  func.func @transform_0(%arg0: i32) -> (i32, i32, i32, i32) {
    %c0_i32 = arith.constant 0 : i32
    %c0_i32_0 = arith.constant 0 : i32
    %c0_i32_1 = arith.constant 0 : i32
    %c0_i32_2 = arith.constant 0 : i32
    return %arg0, %c0_i32, %c0_i32_0, %c0_i32_1 : i32, i32, i32, i32
  }
  func.func @transform_1(%arg0: i32) -> (i32, i32) {
    %c0_i32 = arith.constant 0 : i32
    %c0_i32_0 = arith.constant 0 : i32
    %c0_i32_1 = arith.constant 0 : i32
    return %c0_i32, %c0_i32_0 : i32, i32
  }
  func.func @transform_2(%arg0: i32) -> (i32, i32) {
    %c0_i32 = arith.constant 0 : i32
    %c0_i32_0 = arith.constant 0 : i32
    %c0_i32_1 = arith.constant 0 : i32
    return %c0_i32, %c0_i32_0 : i32, i32
  }
  func.func @transform_3(%arg0: i32) -> (i32, i32) {
    %c0_i32 = arith.constant 0 : i32
    %c0_i32_0 = arith.constant 0 : i32
    %c0_i32_1 = arith.constant 0 : i32
    return %c0_i32, %c0_i32_0 : i32, i32
  }
  func.func @transform_4(%arg0: i32) -> (i32, i32) {
    %c0_i32 = arith.constant 0 : i32
    %c0_i32_0 = arith.constant 0 : i32
    %c0_i32_1 = arith.constant 0 : i32
    return %c0_i32, %c0_i32_0 : i32, i32
  }
  func.func @transform_5(%arg0: i32) -> (i32, i32) {
    %c0_i32 = arith.constant 0 : i32
    %c0_i32_0 = arith.constant 0 : i32
    %c0_i32_1 = arith.constant 0 : i32
    return %c0_i32, %c0_i32_0 : i32, i32
  }
  func.func @transform_6(%arg0: i32) -> (i32, i32) {
    %c0_i32 = arith.constant 0 : i32
    %c0_i32_0 = arith.constant 0 : i32
    %c0_i32_1 = arith.constant 0 : i32
    return %c0_i32, %c0_i32_0 : i32, i32
  }
  func.func @transform_7(%arg0: i32) -> (i32, i32) {
    %c0_i32 = arith.constant 0 : i32
    %c0_i32_0 = arith.constant 0 : i32
    %c0_i32_1 = arith.constant 0 : i32
    return %c0_i32, %c0_i32_0 : i32, i32
  }
  func.func @transform_8(%arg0: i32) -> (i32, i32) {
    %c0_i32 = arith.constant 0 : i32
    %c0_i32_0 = arith.constant 0 : i32
    %c0_i32_1 = arith.constant 0 : i32
    return %c0_i32, %c0_i32_0 : i32, i32
  }
  func.func @transform_9(%arg0: i32) -> (i32, i32, i32) {
    %c0_i32 = arith.constant 0 : i32
    %c0_i32_0 = arith.constant 0 : i32
    %c0_i32_1 = arith.constant 0 : i32
    return %arg0, %c0_i32, %c0_i32_0 : i32, i32, i32
  }
}

</mosaic_0001>

<llo_original>
// kernel: tpu_custom_call.1
$region0: #{tpu_custom_call.1}
  #allocation0 [shape = 'u32[]', space=smem, size = 0x4, offset = 0x4, fixed_abs, tag = 'smem constant byte address 0x4 - core index']
  #allocation1 [shape = 'u32[144,128]{1,0:T(1,128)}', space=vmem, size = 0x12000, scoped, tag = 'internal scratch']
  #allocation2 [shape = 'f32[18,18,8]{2,1,0:T(8,128)}', space=vmem, size = 0x36000, scoped, tag = 'scratch operand']
  %s0 = inlined_call_operand.hbm [shape: f32[2,16,16,16], index: 0, kind: input, shape index: {}]
  %s1 = inlined_call_operand.vmem [shape: f32[16,8], index: 1, kind: input, shape index: {}]
  %s2 = inlined_call_operand.vmem [shape: f32[2,8], index: 2, kind: input, shape index: {}]
  %s3 = inlined_call_operand.vmem [shape: f32[9,8], index: 3, kind: input, shape index: {}]
  %s4 = inlined_call_operand.vmem [shape: f32[2,8], index: 4, kind: input, shape index: {}]
  %s5 = inlined_call_operand.vmem [shape: f32[8,32], index: 5, kind: input, shape index: {}]
  %s6 = inlined_call_operand.vmem [shape: f32[2,32], index: 6, kind: input, shape index: {}]
  %s7 = inlined_call_operand.vmem [shape: f32[16,32], index: 7, kind: input, shape index: {}]
  %s8 = inlined_call_operand.vmem [shape: f32[2,32], index: 8, kind: input, shape index: {}]
  %s9 = inlined_call_operand.vmem [shape: f32[2,64,32], index: 9, kind: output, shape index: {}]
  %s10 = sld [smem:[#allocation0]]
  $region73: #{tpu_custom_call.1} parent=0
    _
  %s12 = ssub.s32 1, %s10
  %s13 = scalar_select 0, %s12, %s10
  $region1: #{tpu_custom_call.1} parent=0
    #allocation3 [shape = 'u8[262144]{0}', space=vmem, size = 0x40000, scoped, tag = 'input window, operand 0']
    #allocation4 [shape = 's32[2]{0}', space=sflag, size = 0x8, scoped, tag = 'scoped memory for tpu_custom_call.1']
    %14 = vsyncpa [#allocation4], 0
    %s15 = scalar_lea.sflag [#allocation4], 1
    %16 = vsyncpa %s15, 0
    loop: start=0, step=1, limit=4
    $region2: #{tpu_custom_call.1} parent=1 // loop_pre_header
      _
    $region3: #{tpu_custom_call.1} parent=1 // loop_header
      %s18 = sphi 0, %s22
      %p19 = scmp.ge.s32.totalorder %s18, 4
      %s28 = sphi 0, %s30
      %s31 = sphi 0, %s28
      %s32 = sphi 0, %s31
      %s48 = sphi 0, %s32
      %s52 = sphi 0, %s52
      %s54 = sphi 0, %s52
      %s55 = sphi 0, %s54
      %s69 = sphi 0, %s55
      %s73 = sphi 0, %s73
      %s75 = sphi 0, %s73
      %s76 = sphi 0, %s75
      %s90 = sphi 0, %s76
      %s94 = sphi 0, %s94
      %s96 = sphi 0, %s94
      %s97 = sphi 0, %s96
      %s111 = sphi 0, %s97
      %s115 = sphi 0, %s115
      %s117 = sphi 0, %s115
      %s118 = sphi 0, %s117
      %s132 = sphi 0, %s118
      %s136 = sphi 0, %s136
      %s138 = sphi 0, %s136
      %s139 = sphi 0, %s138
      %s153 = sphi 0, %s139
      %s157 = sphi 0, %s157
      %s159 = sphi 0, %s157
      %s160 = sphi 0, %s159
      %s174 = sphi 0, %s160
      %s178 = sphi 0, %s178
      %s180 = sphi 0, %s178
      %s181 = sphi 0, %s180
      %s195 = sphi 0, %s181
      %s199 = sphi 0, %s199
      %s201 = sphi 0, %s199
      %s202 = sphi 0, %s201
      %s216 = sphi 0, %s202
      %s222 = sphi 0, %s224
      %s225 = sphi 0, %s222
      %s226 = sphi 0, %s225
      %s242 = sphi 0, %s226
    $region4: #{tpu_custom_call.1} parent=1 // loop_header_branch
      %21 = sbr.rel (%p19) target = $region8
    $region5: #{tpu_custom_call.1} parent=1 // loop_body
      %s23 = ssub.s32 %s18, 1
      %s24 = ssub.s32 %s18, 2
      %s25 = sadd.s32 %s18, 1
      %s26 = ssub.s32 %s18, %s25
      %p27 = scmp.eq.s32.totalorder %s26, 0
      %s29 = sadd.s32 %s28, 1
      %s30 = scalar_select %p27, %s28, %s29
      %p33 = pneg %p27
      %p34 = scmp.eq.s32.totalorder %s18, 1
      %p35 = por %p33, %p34
      %p36 = scmp.ne.s32.totalorder %s28, %s31
      %p37 = scmp.eq.s32.totalorder %s18, 0
      %p38 = por %p36, %p37
      %p39 = scmp.ne.s32.totalorder %s28, %s31
      %p40 = scmp.eq.s32.totalorder %s23, 1
      %p41 = por %p39, %p40
      %p42 = scmp.ne.s32.totalorder %s31, %s32
      %p43 = scmp.eq.s32.totalorder %s23, 0
      %p44 = por %p42, %p43
      %p45 = scmp.ne.s32.totalorder %s31, %s32
      %p46 = scmp.eq.s32.totalorder %s24, 1
      %p47 = por %p45, %p46
      %p49 = scmp.ne.s32.totalorder %s32, %s48
      %p50 = scmp.eq.s32.totalorder %s24, 0
      %p51 = por %p49, %p50
      %s53 = sadd.s32 %s52, 1
      %p56 = scmp.eq.s32.totalorder %s18, 1
      %p57 = scmp.ne.s32.totalorder %s52, %s54
      %p58 = scmp.eq.s32.totalorder %s18, 0
      %p59 = por %p57, %p58
      %p60 = scmp.ne.s32.totalorder %s52, %s54
      %p61 = scmp.eq.s32.totalorder %s23, 1
      %p62 = por %p60, %p61
      %p63 = scmp.ne.s32.totalorder %s54, %s55
      %p64 = scmp.eq.s32.totalorder %s23, 0
      %p65 = por %p63, %p64
      %p66 = scmp.ne.s32.totalorder %s54, %s55
      %p67 = scmp.eq.s32.totalorder %s24, 1
      %p68 = por %p66, %p67
      %p70 = scmp.ne.s32.totalorder %s55, %s69
      %p71 = scmp.eq.s32.totalorder %s24, 0
      %p72 = por %p70, %p71
      %s74 = sadd.s32 %s73, 1
      %p77 = scmp.eq.s32.totalorder %s18, 1
      %p78 = scmp.ne.s32.totalorder %s73, %s75
      %p79 = scmp.eq.s32.totalorder %s18, 0
      %p80 = por %p78, %p79
      %p81 = scmp.ne.s32.totalorder %s73, %s75
      %p82 = scmp.eq.s32.totalorder %s23, 1
      %p83 = por %p81, %p82
      %p84 = scmp.ne.s32.totalorder %s75, %s76
      %p85 = scmp.eq.s32.totalorder %s23, 0
      %p86 = por %p84, %p85
      %p87 = scmp.ne.s32.totalorder %s75, %s76
      %p88 = scmp.eq.s32.totalorder %s24, 1
      %p89 = por %p87, %p88
      %p91 = scmp.ne.s32.totalorder %s76, %s90
      %p92 = scmp.eq.s32.totalorder %s24, 0
      %p93 = por %p91, %p92
      %s95 = sadd.s32 %s94, 1
      %p98 = scmp.eq.s32.totalorder %s18, 1
      %p99 = scmp.ne.s32.totalorder %s94, %s96
      %p100 = scmp.eq.s32.totalorder %s18, 0
      %p101 = por %p99, %p100
      %p102 = scmp.ne.s32.totalorder %s94, %s96
      %p103 = scmp.eq.s32.totalorder %s23, 1
      %p104 = por %p102, %p103
      %p105 = scmp.ne.s32.totalorder %s96, %s97
      %p106 = scmp.eq.s32.totalorder %s23, 0
      %p107 = por %p105, %p106
      %p108 = scmp.ne.s32.totalorder %s96, %s97
      %p109 = scmp.eq.s32.totalorder %s24, 1
      %p110 = por %p108, %p109
      %p112 = scmp.ne.s32.totalorder %s97, %s111
      %p113 = scmp.eq.s32.totalorder %s24, 0
      %p114 = por %p112, %p113
      %s116 = sadd.s32 %s115, 1
      %p119 = scmp.eq.s32.totalorder %s18, 1
      %p120 = scmp.ne.s32.totalorder %s115, %s117
      %p121 = scmp.eq.s32.totalorder %s18, 0
      %p122 = por %p120, %p121
      %p123 = scmp.ne.s32.totalorder %s115, %s117
      %p124 = scmp.eq.s32.totalorder %s23, 1
      %p125 = por %p123, %p124
      %p126 = scmp.ne.s32.totalorder %s117, %s118
      %p127 = scmp.eq.s32.totalorder %s23, 0
      %p128 = por %p126, %p127
      %p129 = scmp.ne.s32.totalorder %s117, %s118
      %p130 = scmp.eq.s32.totalorder %s24, 1
      %p131 = por %p129, %p130
      %p133 = scmp.ne.s32.totalorder %s118, %s132
      %p134 = scmp.eq.s32.totalorder %s24, 0
      %p135 = por %p133, %p134
      %s137 = sadd.s32 %s136, 1
      %p140 = scmp.eq.s32.totalorder %s18, 1
      %p141 = scmp.ne.s32.totalorder %s136, %s138
      %p142 = scmp.eq.s32.totalorder %s18, 0
      %p143 = por %p141, %p142
      %p144 = scmp.ne.s32.totalorder %s136, %s138
      %p145 = scmp.eq.s32.totalorder %s23, 1
      %p146 = por %p144, %p145
      %p147 = scmp.ne.s32.totalorder %s138, %s139
      %p148 = scmp.eq.s32.totalorder %s23, 0
      %p149 = por %p147, %p148
      %p150 = scmp.ne.s32.totalorder %s138, %s139
      %p151 = scmp.eq.s32.totalorder %s24, 1
      %p152 = por %p150, %p151
      %p154 = scmp.ne.s32.totalorder %s139, %s153
      %p155 = scmp.eq.s32.totalorder %s24, 0
      %p156 = por %p154, %p155
      %s158 = sadd.s32 %s157, 1
      %p161 = scmp.eq.s32.totalorder %s18, 1
      %p162 = scmp.ne.s32.totalorder %s157, %s159
      %p163 = scmp.eq.s32.totalorder %s18, 0
      %p164 = por %p162, %p163
      %p165 = scmp.ne.s32.totalorder %s157, %s159
      %p166 = scmp.eq.s32.totalorder %s23, 1
      %p167 = por %p165, %p166
      %p168 = scmp.ne.s32.totalorder %s159, %s160
      %p169 = scmp.eq.s32.totalorder %s23, 0
      %p170 = por %p168, %p169
      %p171 = scmp.ne.s32.totalorder %s159, %s160
      %p172 = scmp.eq.s32.totalorder %s24, 1
      %p173 = por %p171, %p172
      %p175 = scmp.ne.s32.totalorder %s160, %s174
      %p176 = scmp.eq.s32.totalorder %s24, 0
      %p177 = por %p175, %p176
      %s179 = sadd.s32 %s178, 1
      %p182 = scmp.eq.s32.totalorder %s18, 1
      %p183 = scmp.ne.s32.totalorder %s178, %s180
      %p184 = scmp.eq.s32.totalorder %s18, 0
      %p185 = por %p183, %p184
      %p186 = scmp.ne.s32.totalorder %s178, %s180
      %p187 = scmp.eq.s32.totalorder %s23, 1
      %p188 = por %p186, %p187
      %p189 = scmp.ne.s32.totalorder %s180, %s181
      %p190 = scmp.eq.s32.totalorder %s23, 0
      %p191 = por %p189, %p190
      %p192 = scmp.ne.s32.totalorder %s180, %s181
      %p193 = scmp.eq.s32.totalorder %s24, 1
      %p194 = por %p192, %p193
      %p196 = scmp.ne.s32.totalorder %s181, %s195
      %p197 = scmp.eq.s32.totalorder %s24, 0
      %p198 = por %p196, %p197
      %s200 = sadd.s32 %s199, 1
      %p203 = scmp.eq.s32.totalorder %s18, 1
      %p204 = scmp.ne.s32.totalorder %s199, %s201
      %p205 = scmp.eq.s32.totalorder %s18, 0
      %p206 = por %p204, %p205
      %p207 = scmp.ne.s32.totalorder %s199, %s201
      %p208 = scmp.eq.s32.totalorder %s23, 1
      %p209 = por %p207, %p208
      %p210 = scmp.ne.s32.totalorder %s201, %s202
      %p211 = scmp.eq.s32.totalorder %s23, 0
      %p212 = por %p210, %p211
      %p213 = scmp.ne.s32.totalorder %s201, %s202
      %p214 = scmp.eq.s32.totalorder %s24, 1
      %p215 = por %p213, %p214
      %p217 = scmp.ne.s32.totalorder %s202, %s216
      %p218 = scmp.eq.s32.totalorder %s24, 0
      %p219 = por %p217, %p218
      %s220 = ssub.s32 %s18, %s25
      %p221 = scmp.eq.s32.totalorder %s220, 0
      %s223 = sadd.s32 %s222, 1
      %s224 = scalar_select %p221, %s222, %s223
      %p227 = pneg %p221
      %p228 = scmp.eq.s32.totalorder %s18, 1
      %p229 = por %p227, %p228
      %p230 = scmp.ne.s32.totalorder %s222, %s225
      %p231 = scmp.eq.s32.totalorder %s18, 0
      %p232 = por %p230, %p231
      %p233 = scmp.ne.s32.totalorder %s222, %s225
      %p234 = scmp.eq.s32.totalorder %s23, 1
      %p235 = por %p233, %p234
      %p236 = scmp.ne.s32.totalorder %s225, %s226
      %p237 = scmp.eq.s32.totalorder %s23, 0
      %p238 = por %p236, %p237
      %p239 = scmp.ne.s32.totalorder %s225, %s226
      %p240 = scmp.eq.s32.totalorder %s24, 1
      %p241 = por %p239, %p240
      %p243 = scmp.ne.s32.totalorder %s226, %s242
      %p244 = scmp.eq.s32.totalorder %s24, 0
      %p245 = por %p243, %p244
      %p246 = scmp.le.s32.totalorder 1, %s18
      %p247 = scmp.lt.s32.totalorder %s18, 3
      %p248 = pnand %p246, %p247
      %p249 = pneg %p248
      // Predicated region
      $region9: #{tpu_custom_call.1} parent=5 // pred_check
        _
      $region10: #{tpu_custom_call.1} parent=5 // pred_check_branch
        %251 = sbr.rel (%p248) target = $region12
      $region11: #{tpu_custom_call.1} parent=5 // pred_region
        %s252 = ssub.s32 %s18, 1
        // Predicated region
        $region13: #{tpu_custom_call.1} parent=11 // pred_check
          %p253 = pneg %p65
        $region14: #{tpu_custom_call.1} parent=11 // pred_check_branch
          %255 = sbr.rel (%p253) target = $region16
        $region15: #{tpu_custom_call.1} parent=11 // pred_region
          _
        $region16: #{tpu_custom_call.1} parent=11 // pred_fallthru
          _
        // Predicated region
        $region17: #{tpu_custom_call.1} parent=11 // pred_check
          %p256 = pneg %p86
        $region18: #{tpu_custom_call.1} parent=11 // pred_check_branch
          %258 = sbr.rel (%p256) target = $region20
        $region19: #{tpu_custom_call.1} parent=11 // pred_region
          _
        $region20: #{tpu_custom_call.1} parent=11 // pred_fallthru
          _
        // Predicated region
        $region21: #{tpu_custom_call.1} parent=11 // pred_check
          %p259 = pneg %p107
        $region22: #{tpu_custom_call.1} parent=11 // pred_check_branch
          %261 = sbr.rel (%p259) target = $region24
        $region23: #{tpu_custom_call.1} parent=11 // pred_region
          _
        $region24: #{tpu_custom_call.1} parent=11 // pred_fallthru
          _
        // Predicated region
        $region25: #{tpu_custom_call.1} parent=11 // pred_check
          %p262 = pneg %p128
        $region26: #{tpu_custom_call.1} parent=11 // pred_check_branch
          %264 = sbr.rel (%p262) target = $region28
        $region27: #{tpu_custom_call.1} parent=11 // pred_region
          _
        $region28: #{tpu_custom_call.1} parent=11 // pred_fallthru
          _
        // Predicated region
        $region29: #{tpu_custom_call.1} parent=11 // pred_check
          %p265 = pneg %p149
        $region30: #{tpu_custom_call.1} parent=11 // pred_check_branch
          %267 = sbr.rel (%p265) target = $region32
        $region31: #{tpu_custom_call.1} parent=11 // pred_region
          _
        $region32: #{tpu_custom_call.1} parent=11 // pred_fallthru
          _
        // Predicated region
        $region33: #{tpu_custom_call.1} parent=11 // pred_check
          %p268 = pneg %p170
        $region34: #{tpu_custom_call.1} parent=11 // pred_check_branch
          %270 = sbr.rel (%p268) target = $region36
        $region35: #{tpu_custom_call.1} parent=11 // pred_region
          _
        $region36: #{tpu_custom_call.1} parent=11 // pred_fallthru
          _
        // Predicated region
        $region37: #{tpu_custom_call.1} parent=11 // pred_check
          %p271 = pneg %p191
        $region38: #{tpu_custom_call.1} parent=11 // pred_check_branch
          %273 = sbr.rel (%p271) target = $region40
        $region39: #{tpu_custom_call.1} parent=11 // pred_region
          _
        $region40: #{tpu_custom_call.1} parent=11 // pred_fallthru
          _
        // Predicated region
        $region41: #{tpu_custom_call.1} parent=11 // pred_check
          %p274 = pneg %p212
        $region42: #{tpu_custom_call.1} parent=11 // pred_check_branch
          %276 = sbr.rel (%p274) target = $region44
        $region43: #{tpu_custom_call.1} parent=11 // pred_region
          _
        $region44: #{tpu_custom_call.1} parent=11 // pred_fallthru
          _
      $region12: #{tpu_custom_call.1} parent=5 // pred_fallthru
        _
      %p277 = scmp.lt.s32.totalorder %s18, 2
      // Predicated region
      $region45: #{tpu_custom_call.1} parent=5 // pred_check
        %p278 = pneg %p277
      $region46: #{tpu_custom_call.1} parent=5 // pred_check_branch
        %280 = sbr.rel (%p278) target = $region48
      $region47: #{tpu_custom_call.1} parent=5 // pred_region
        // Predicated region
        $region49: #{tpu_custom_call.1} parent=47 // pred_check
          %p281 = pneg %p38
        $region50: #{tpu_custom_call.1} parent=47 // pred_check_branch
          %283 = sbr.rel (%p281) target = $region52
        $region51: #{tpu_custom_call.1} parent=47 // pred_region
          %s284 = sand.u32 %s28, 1
          %s285 = scalar_lea.sflag [#allocation4], %s284
          %s286 = sand.u32 %s28, 1
          %s287 = smul.addr %s286, 256
          %s288 = scalar_lea.vmem [#allocation3], %s287
          %s290 = ssub.s32 4096, 4096
          %291 = vsyncadd %s285, %s290
          %s292 = smul.addr %s18, 32
          %s293 = smul.addr %s292, 128
          %s294 = scalar_lea.hbm %s0, %s293
          %s295 = sshll.u32 %s288, 4
          %s296 = int_to_ptr.vmem [resolvable:$true] %s295
          %301 = dma.hbm_to_vmem [thread:$0]  %s294, 4096, %s296, %s285, 128, 128, 8
        $region52: #{tpu_custom_call.1} parent=47 // pred_fallthru
          _
      $region48: #{tpu_custom_call.1} parent=5 // pred_fallthru
        _
      %p302 = scmp.le.s32.totalorder 1, %s18
      %p303 = scmp.lt.s32.totalorder %s18, 3
      %p304 = pnand %p302, %p303
      %p305 = pneg %p304
      // Predicated region
      $region53: #{tpu_custom_call.1} parent=5 // pred_check
        _
      $region54: #{tpu_custom_call.1} parent=5 // pred_check_branch
        %307 = sbr.rel (%p304) target = $region56
      $region55: #{tpu_custom_call.1} parent=5 // pred_region
        %s308 = ssub.s32 %s18, 1
        %s309 = sand.u32 %s31, 1
        %s310 = scalar_lea.sflag [#allocation4], %s309
        %s311 = sand.u32 %s31, 1
        %s312 = smul.addr %s311, 256
        %s313 = scalar_lea.vmem [#allocation3], %s312
        // Predicated region
        $region57: #{tpu_custom_call.1} parent=55 // pred_check
          %p314 = pneg %p44
        $region58: #{tpu_custom_call.1} parent=55 // pred_check_branch
          %316 = sbr.rel (%p314) target = $region60
        $region59: #{tpu_custom_call.1} parent=55 // pred_region
          %317 = dma.done %s310, 4096
        $region60: #{tpu_custom_call.1} parent=55 // pred_fallthru
          _
        %s318 = sand.u32 %s31, 1
        %s319 = scalar_lea.sflag [#allocation4], %s318
        %s320 = sand.u32 %s31, 1
        %s321 = smul.addr %s320, 256
        %s322 = scalar_lea.vmem [#allocation3], %s321
        %p323 = pneg %p44
        %p324 = pneg %p41
        %p325 = pneg %p65
        %p326 = pneg %p62
        %p327 = pneg %p86
        %p328 = pneg %p83
        %p329 = pneg %p107
        %p330 = pneg %p104
        %p331 = pneg %p128
        %p332 = pneg %p125
        %p333 = pneg %p149
        %p334 = pneg %p146
        %p335 = pneg %p170
        %p336 = pneg %p167
        %p337 = pneg %p191
        %p338 = pneg %p188
        %p339 = pneg %p212
        %p340 = pneg %p209
        %p341 = pneg %p238
        %p342 = pneg %p235
        %p343 = scmp.lt.s32.totalorder %s23, 1
        %s344 = scalar_select %p343, %s23, 1
        %s345 = smul.addr %s344, 8
        %s346 = smul.addr %s345, 8
        %s347 = scalar_lea.vmem %s9, %s346
        %p348 = scmp.lt.s32.totalorder %s23, 1
        %s349 = scalar_select %p348, %s23, 1
        %s350 = smul.addr %s349, 8
        %s351 = smul.addr %s350, 8
        %s352 = scalar_lea.vmem %s9, %s351
        %v353 = vld [vmem:[%s313] sm:$0xff]
        %v354 = vld [vmem:[%s313 + $0x8] sm:$0xff]
        %v355 = vld [vmem:[%s313 + $0x10] sm:$0xff]
        %v356 = vld [vmem:[%s313 + $0x18] sm:$0xff]
        %v357 = vld [vmem:[%s313 + $0x20] sm:$0xff]
        %v358 = vld [vmem:[%s313 + $0x28] sm:$0xff]
        %v359 = vld [vmem:[%s313 + $0x30] sm:$0xff]
        %v360 = vld [vmem:[%s313 + $0x38] sm:$0xff]
        %v361 = vld [vmem:[%s313 + $0x40] sm:$0xff]
        %v362 = vld [vmem:[%s313 + $0x48] sm:$0xff]
        %v363 = vld [vmem:[%s313 + $0x50] sm:$0xff]
        %v364 = vld [vmem:[%s313 + $0x58] sm:$0xff]
        %v365 = vld [vmem:[%s313 + $0x60] sm:$0xff]
        %v366 = vld [vmem:[%s313 + $0x68] sm:$0xff]
        %v367 = vld [vmem:[%s313 + $0x70] sm:$0xff]
        %v368 = vld [vmem:[%s313 + $0x78] sm:$0xff]
        %v369 = vld [vmem:[%s313 + $0x80] sm:$0xff]
        %v370 = vld [vmem:[%s313 + $0x88] sm:$0xff]
        %v371 = vld [vmem:[%s313 + $0x90] sm:$0xff]
        %v372 = vld [vmem:[%s313 + $0x98] sm:$0xff]
        %v373 = vld [vmem:[%s313 + $0xa0] sm:$0xff]
        %v374 = vld [vmem:[%s313 + $0xa8] sm:$0xff]
        %v375 = vld [vmem:[%s313 + $0xb0] sm:$0xff]
        %v376 = vld [vmem:[%s313 + $0xb8] sm:$0xff]
        %v377 = vld [vmem:[%s313 + $0xc0] sm:$0xff]
        %v378 = vld [vmem:[%s313 + $0xc8] sm:$0xff]
        %v379 = vld [vmem:[%s313 + $0xd0] sm:$0xff]
        %v380 = vld [vmem:[%s313 + $0xd8] sm:$0xff]
        %v381 = vld [vmem:[%s313 + $0xe0] sm:$0xff]
        %v382 = vld [vmem:[%s313 + $0xe8] sm:$0xff]
        %v383 = vld [vmem:[%s313 + $0xf0] sm:$0xff]
        %v384 = vld [vmem:[%s313 + $0xf8] sm:$0xff]
        %v385 = vld [vmem:[%s1] sm:$0xff]
        %v386 = vld [vmem:[%s1 + $0x8] sm:$0xff]
        %vm387 = vcmask 130048
        %v389 = vsel %vm387, %v353, 0
        %v392 = vsel %vm387, %v354, 0
        %v395 = vsel %vm387, %v355, 0
        %v398 = vsel %vm387, %v356, 0
        %v401 = vsel %vm387, %v357, 0
        %v404 = vsel %vm387, %v358, 0
        %v407 = vsel %vm387, %v359, 0
        %v410 = vsel %vm387, %v360, 0
        %v413 = vsel %vm387, %v361, 0
        %v416 = vsel %vm387, %v362, 0
        %v419 = vsel %vm387, %v363, 0
        %v422 = vsel %vm387, %v364, 0
        %v425 = vsel %vm387, %v365, 0
        %v428 = vsel %vm387, %v366, 0
        %v431 = vsel %vm387, %v367, 0
        %v434 = vsel %vm387, %v368, 0
        %v437 = vsel %vm387, %v369, 0
        %v440 = vsel %vm387, %v370, 0
        %v443 = vsel %vm387, %v371, 0
        %v446 = vsel %vm387, %v372, 0
        %v449 = vsel %vm387, %v373, 0
        %v452 = vsel %vm387, %v374, 0
        %v455 = vsel %vm387, %v375, 0
        %v458 = vsel %vm387, %v376, 0
        %v461 = vsel %vm387, %v377, 0
        %v464 = vsel %vm387, %v378, 0
        %v467 = vsel %vm387, %v379, 0
        %v470 = vsel %vm387, %v380, 0
        %v473 = vsel %vm387, %v381, 0
        %v476 = vsel %vm387, %v382, 0
        %v479 = vsel %vm387, %v383, 0
        %v482 = vsel %vm387, %v384, 0
        %484 = vmatprep.subr.mxu0 0.0
        %485 = vmatpush1.msra.mxu0 %v385
        %486 = vmatprep.subr.mxu0 0.0
        %487 = vmatpush1.msra.mxu0 %v386
        %488 = vmatprep.subr.mxu0 0.0
        %489 = vmatpush1.msra.mxu0 0.0
        %490 = vmatprep.subr.mxu0 0.0
        %491 = vmatpush1.msra.mxu0 0.0
        %492 = vmatprep.subr.mxu0 0.0
        %493 = vmatpush1.msra.mxu0 0.0
        %494 = vmatprep.subr.mxu0 0.0
        %495 = vmatpush1.msra.mxu0 0.0
        %496 = vmatprep.subr.mxu0 0.0
        %497 = vmatpush1.msra.mxu0 0.0
        %498 = vmatprep.subr.mxu0 0.0
        %499 = vmatpush1.msra.mxu0 0.0
        %500 = vmatprep.subr.mxu0 0.0
        %501 = vmatpush1.msra.mxu0 0.0
        %502 = vmatprep.subr.mxu0 0.0
        %503 = vmatpush1.msra.mxu0 0.0
        %504 = vmatprep.subr.mxu0 0.0
        %505 = vmatpush1.msra.mxu0 0.0
        %506 = vmatprep.subr.mxu0 0.0
        %507 = vmatpush1.msra.mxu0 0.0
        %508 = vmatprep.subr.mxu0 0.0
        %509 = vmatpush1.msra.mxu0 0.0
        %510 = vmatprep.subr.mxu0 0.0
        %511 = vmatpush1.msra.mxu0 0.0
        %512 = vmatprep.subr.mxu0 0.0
        %513 = vmatpush1.msra.mxu0 0.0
        %514 = vmatprep.subr.mxu0 0.0
        %515 = vmatpush1.msra.mxu0 0.0
        %516 = vmatprep.subr.mxu0 0.0
        %517 = vmatpush1.msra.mxu0 0.0
        %518 = vmatprep.subr.mxu0 0.0
        %519 = vmatpush1.msra.mxu0 0.0
        %520 = vmatprep.subr.mxu0 0.0
        %521 = vmatpush1.msra.mxu0 0.0
        %522 = vmatprep.subr.mxu0 0.0
        %523 = vmatpush1.msra.mxu0 0.0
        %524 = vmatprep.subr.mxu0 0.0
        %525 = vmatpush1.msra.mxu0 0.0
        %526 = vmatprep.subr.mxu0 0.0
        %527 = vmatpush1.msra.mxu0 0.0
        %528 = vmatprep.subr.mxu0 0.0
        %529 = vmatpush1.msra.mxu0 0.0
        %530 = vmatprep.subr.mxu0 0.0
        %531 = vmatpush1.msra.mxu0 0.0
        %532 = vmatprep.subr.mxu0 0.0
        %533 = vmatpush1.msra.mxu0 0.0
        %534 = vmatprep.subr.mxu0 0.0
        %535 = vmatpush1.msra.mxu0 0.0
        %536 = vmatprep.subr.mxu0 0.0
        %537 = vmatpush1.msra.mxu0 0.0
        %538 = vmatprep.subr.mxu0 0.0
        %539 = vmatpush1.msra.mxu0 0.0
        %540 = vmatprep.subr.mxu0 0.0
        %541 = vmatpush1.msra.mxu0 0.0
        %542 = vmatprep.subr.mxu0 0.0
        %543 = vmatpush1.msra.mxu0 0.0
        %544 = vmatprep.subr.mxu0 0.0
        %545 = vmatpush1.msra.mxu0 0.0
        %546 = vmatprep.subr.mxu0 0.0
        %547 = vmatpush1.msra.mxu0 0.0
        %548 = vmatprep.mubr.f32.mxu0 0.0
        %549 = vmatmul.mubr.f32.gmra.mrb[0].mxu0 %v389
        %v550 = vpop.f32.mrb[0].mxu0
        %v551 = vadd.f32 0.0, %v550
        %v552 = vpop.f32.mrb[0].mxu0
        %553 = vmatprep.mubr.f32.mxu0 0.0
        %554 = vmatmul.mubr.f32.gmra.mrb[0].mxu0 %v392
        %v555 = vpop.f32.mrb[0].mxu0
        %v556 = vadd.f32 0.0, %v555
        %v557 = vpop.f32.mrb[0].mxu0
        %558 = vmatprep.mubr.f32.mxu0 0.0
        %559 = vmatmul.mubr.f32.gmra.mrb[0].mxu0 %v395
        %v560 = vpop.f32.mrb[0].mxu0
        %v561 = vadd.f32 0.0, %v560
        %v562 = vpop.f32.mrb[0].mxu0
        %563 = vmatprep.mubr.f32.mxu0 0.0
        %564 = vmatmul.mubr.f32.gmra.mrb[0].mxu0 %v398
        %v565 = vpop.f32.mrb[0].mxu0
        %v566 = vadd.f32 0.0, %v565
        %v567 = vpop.f32.mrb[0].mxu0
        %568 = vmatprep.mubr.f32.mxu0 0.0
        %569 = vmatmul.mubr.f32.gmra.mrb[0].mxu0 %v401
        %v570 = vpop.f32.mrb[0].mxu0
        %v571 = vadd.f32 0.0, %v570
        %v572 = vpop.f32.mrb[0].mxu0
        %573 = vmatprep.mubr.f32.mxu0 0.0
        %574 = vmatmul.mubr.f32.gmra.mrb[0].mxu0 %v404
        %v575 = vpop.f32.mrb[0].mxu0
        %v576 = vadd.f32 0.0, %v575
        %v577 = vpop.f32.mrb[0].mxu0
        %578 = vmatprep.mubr.f32.mxu0 0.0
        %579 = vmatmul.mubr.f32.gmra.mrb[0].mxu0 %v407
        %v580 = vpop.f32.mrb[0].mxu0
        %v581 = vadd.f32 0.0, %v580
        %v582 = vpop.f32.mrb[0].mxu0
        %583 = vmatprep.mubr.f32.mxu0 0.0
        %584 = vmatmul.mubr.f32.gmra.mrb[0].mxu0 %v410
        %v585 = vpop.f32.mrb[0].mxu0
        %v586 = vadd.f32 0.0, %v585
        %v587 = vpop.f32.mrb[0].mxu0
        %588 = vmatprep.mubr.f32.mxu0 0.0
        %589 = vmatmul.mubr.f32.gmra.mrb[0].mxu0 %v413
        %v590 = vpop.f32.mrb[0].mxu0
        %v591 = vadd.f32 0.0, %v590
        %v592 = vpop.f32.mrb[0].mxu0
        %593 = vmatprep.mubr.f32.mxu0 0.0
        %594 = vmatmul.mubr.f32.gmra.mrb[0].mxu0 %v416
        %v595 = vpop.f32.mrb[0].mxu0
        %v596 = vadd.f32 0.0, %v595
        %v597 = vpop.f32.mrb[0].mxu0
        %598 = vmatprep.mubr.f32.mxu0 0.0
        %599 = vmatmul.mubr.f32.gmra.mrb[0].mxu0 %v419
        %v600 = vpop.f32.mrb[0].mxu0
        %v601 = vadd.f32 0.0, %v600
        %v602 = vpop.f32.mrb[0].mxu0
        %603 = vmatprep.mubr.f32.mxu0 0.0
        %604 = vmatmul.mubr.f32.gmra.mrb[0].mxu0 %v422
        %v605 = vpop.f32.mrb[0].mxu0
        %v606 = vadd.f32 0.0, %v605
        %v607 = vpop.f32.mrb[0].mxu0
        %608 = vmatprep.mubr.f32.mxu0 0.0
        %609 = vmatmul.mubr.f32.gmra.mrb[0].mxu0 %v425
        %v610 = vpop.f32.mrb[0].mxu0
        %v611 = vadd.f32 0.0, %v610
        %v612 = vpop.f32.mrb[0].mxu0
        %613 = vmatprep.mubr.f32.mxu0 0.0
        %614 = vmatmul.mubr.f32.gmra.mrb[0].mxu0 %v428
        %v615 = vpop.f32.mrb[0].mxu0
        %v616 = vadd.f32 0.0, %v615
        %v617 = vpop.f32.mrb[0].mxu0
        %618 = vmatprep.mubr.f32.mxu0 0.0
        %619 = vmatmul.mubr.f32.gmra.mrb[0].mxu0 %v431
        %v620 = vpop.f32.mrb[0].mxu0
        %v621 = vadd.f32 0.0, %v620
        %v622 = vpop.f32.mrb[0].mxu0
        %623 = vmatprep.mubr.f32.mxu0 0.0
        %624 = vmatmul.mubr.f32.gmra.mrb[0].mxu0 %v434
        %v625 = vpop.f32.mrb[0].mxu0
        %v626 = vadd.f32 0.0, %v625
        %v627 = vpop.f32.mrb[0].mxu0
        %628 = vmatprep.mubr.f32.mxu0 0.0
        %629 = vmatmul.mubr.f32.gmra.mrb[0].mxu0 %v437
        %v630 = vpop.f32.mrb[0].mxu0
        %v631 = vadd.f32 0.0, %v630
        %v632 = vpop.f32.mrb[0].mxu0
        %633 = vmatprep.mubr.f32.mxu0 0.0
        %634 = vmatmul.mubr.f32.gmra.mrb[0].mxu0 %v440
        %v635 = vpop.f32.mrb[0].mxu0
        %v636 = vadd.f32 0.0, %v635
        %v637 = vpop.f32.mrb[0].mxu0
        %638 = vmatprep.mubr.f32.mxu0 0.0
        %639 = vmatmul.mubr.f32.gmra.mrb[0].mxu0 %v443
        %v640 = vpop.f32.mrb[0].mxu0
        %v641 = vadd.f32 0.0, %v640
        %v642 = vpop.f32.mrb[0].mxu0
        %643 = vmatprep.mubr.f32.mxu0 0.0
        %644 = vmatmul.mubr.f32.gmra.mrb[0].mxu0 %v446
        %v645 = vpop.f32.mrb[0].mxu0
        %v646 = vadd.f32 0.0, %v645
        %v647 = vpop.f32.mrb[0].mxu0
        %648 = vmatprep.mubr.f32.mxu0 0.0
        %649 = vmatmul.mubr.f32.gmra.mrb[0].mxu0 %v449
        %v650 = vpop.f32.mrb[0].mxu0
        %v651 = vadd.f32 0.0, %v650
        %v652 = vpop.f32.mrb[0].mxu0
        %653 = vmatprep.mubr.f32.mxu0 0.0
        %654 = vmatmul.mubr.f32.gmra.mrb[0].mxu0 %v452
        %v655 = vpop.f32.mrb[0].mxu0
        %v656 = vadd.f32 0.0, %v655
        %v657 = vpop.f32.mrb[0].mxu0
        %658 = vmatprep.mubr.f32.mxu0 0.0
        %659 = vmatmul.mubr.f32.gmra.mrb[0].mxu0 %v455
        %v660 = vpop.f32.mrb[0].mxu0
        %v661 = vadd.f32 0.0, %v660
        %v662 = vpop.f32.mrb[0].mxu0
        %663 = vmatprep.mubr.f32.mxu0 0.0
        %664 = vmatmul.mubr.f32.gmra.mrb[0].mxu0 %v458
        %v665 = vpop.f32.mrb[0].mxu0
        %v666 = vadd.f32 0.0, %v665
        %v667 = vpop.f32.mrb[0].mxu0
        %668 = vmatprep.mubr.f32.mxu0 0.0
        %669 = vmatmul.mubr.f32.gmra.mrb[0].mxu0 %v461
        %v670 = vpop.f32.mrb[0].mxu0
        %v671 = vadd.f32 0.0, %v670
        %v672 = vpop.f32.mrb[0].mxu0
        %673 = vmatprep.mubr.f32.mxu0 0.0
        %674 = vmatmul.mubr.f32.gmra.mrb[0].mxu0 %v464
        %v675 = vpop.f32.mrb[0].mxu0
        %v676 = vadd.f32 0.0, %v675
        %v677 = vpop.f32.mrb[0].mxu0
        %678 = vmatprep.mubr.f32.mxu0 0.0
        %679 = vmatmul.mubr.f32.gmra.mrb[0].mxu0 %v467
        %v680 = vpop.f32.mrb[0].mxu0
        %v681 = vadd.f32 0.0, %v680
        %v682 = vpop.f32.mrb[0].mxu0
        %683 = vmatprep.mubr.f32.mxu0 0.0
        %684 = vmatmul.mubr.f32.gmra.mrb[0].mxu0 %v470
        %v685 = vpop.f32.mrb[0].mxu0
        %v686 = vadd.f32 0.0, %v685
        %v687 = vpop.f32.mrb[0].mxu0
        %688 = vmatprep.mubr.f32.mxu0 0.0
        %689 = vmatmul.mubr.f32.gmra.mrb[0].mxu0 %v473
        %v690 = vpop.f32.mrb[0].mxu0
        %v691 = vadd.f32 0.0, %v690
        %v692 = vpop.f32.mrb[0].mxu0
        %693 = vmatprep.mubr.f32.mxu0 0.0
        %694 = vmatmul.mubr.f32.gmra.mrb[0].mxu0 %v476
        %v695 = vpop.f32.mrb[0].mxu0
        %v696 = vadd.f32 0.0, %v695
        %v697 = vpop.f32.mrb[0].mxu0
        %698 = vmatprep.mubr.f32.mxu0 0.0
        %699 = vmatmul.mubr.f32.gmra.mrb[0].mxu0 %v479
        %v700 = vpop.f32.mrb[0].mxu0
        %v701 = vadd.f32 0.0, %v700
        %v702 = vpop.f32.mrb[0].mxu0
        %703 = vmatprep.mubr.f32.mxu0 0.0
        %704 = vmatmul.mubr.f32.gmra.mrb[0].mxu0 %v482
        %v705 = vpop.f32.mrb[0].mxu0
        %v706 = vadd.f32 0.0, %v705
        %v707 = vpop.f32.mrb[0].mxu0
        %708 = vdwg.mxu0
        %v709 = vld [vmem:[%s2] sm:$0x1]
        %v710 = vlaneseq
        %v711 = vshrl.u32 %v710, 7
        %v712 = vsub.s32 0, %v711
        %v713 = vrot.slane %v709, %v712
        %v714 = vmul.f32 %v551, %v713
        %v715 = vmul.f32 %v556, %v713
        %v716 = vmul.f32 %v561, %v713
        %v717 = vmul.f32 %v566, %v713
        %v718 = vmul.f32 %v571, %v713
        %v719 = vmul.f32 %v576, %v713
        %v720 = vmul.f32 %v581, %v713
        %v721 = vmul.f32 %v586, %v713
        %v722 = vmul.f32 %v591, %v713
        %v723 = vmul.f32 %v596, %v713
        %v724 = vmul.f32 %v601, %v713
        %v725 = vmul.f32 %v606, %v713
        %v726 = vmul.f32 %v611, %v713
        %v727 = vmul.f32 %v616, %v713
        %v728 = vmul.f32 %v621, %v713
        %v729 = vmul.f32 %v626, %v713
        %v730 = vmul.f32 %v631, %v713
        %v731 = vmul.f32 %v636, %v713
        %v732 = vmul.f32 %v641, %v713
        %v733 = vmul.f32 %v646, %v713
        %v734 = vmul.f32 %v651, %v713
        %v735 = vmul.f32 %v656, %v713
        %v736 = vmul.f32 %v661, %v713
        %v737 = vmul.f32 %v666, %v713
        %v738 = vmul.f32 %v671, %v713
        %v739 = vmul.f32 %v676, %v713
        %v740 = vmul.f32 %v681, %v713
        %v741 = vmul.f32 %v686, %v713
        %v742 = vmul.f32 %v691, %v713
        %v743 = vmul.f32 %v696, %v713
        %v744 = vmul.f32 %v701, %v713
        %v745 = vmul.f32 %v706, %v713
        %v746 = vld [vmem:[%s2 + $0x1] sm:$0x1]
        %v747 = vlaneseq
        %v748 = vshrl.u32 %v747, 7
        %v749 = vsub.s32 0, %v748
        %v750 = vrot.slane %v746, %v749
        %v751 = vadd.f32 %v714, %v750
        %v752 = vadd.f32 %v715, %v750
        %v753 = vadd.f32 %v716, %v750
        %v754 = vadd.f32 %v717, %v750
        %v755 = vadd.f32 %v718, %v750
        %v756 = vadd.f32 %v719, %v750
        %v757 = vadd.f32 %v720, %v750
        %v758 = vadd.f32 %v721, %v750
        %v759 = vadd.f32 %v722, %v750
        %v760 = vadd.f32 %v723, %v750
        %v761 = vadd.f32 %v724, %v750
        %v762 = vadd.f32 %v725, %v750
        %v763 = vadd.f32 %v726, %v750
        %v764 = vadd.f32 %v727, %v750
        %v765 = vadd.f32 %v728, %v750
        %v766 = vadd.f32 %v729, %v750
        %v767 = vadd.f32 %v730, %v750
        %v768 = vadd.f32 %v731, %v750
        %v769 = vadd.f32 %v732, %v750
        %v770 = vadd.f32 %v733, %v750
        %v771 = vadd.f32 %v734, %v750
        %v772 = vadd.f32 %v735, %v750
        %v773 = vadd.f32 %v736, %v750
        %v774 = vadd.f32 %v737, %v750
        %v775 = vadd.f32 %v738, %v750
        %v776 = vadd.f32 %v739, %v750
        %v777 = vadd.f32 %v740, %v750
        %v778 = vadd.f32 %v741, %v750
        %v779 = vadd.f32 %v742, %v750
        %v780 = vadd.f32 %v743, %v750
        %v781 = vadd.f32 %v744, %v750
        %v782 = vadd.f32 %v745, %v750
        %v783 = vmax.f32 %v751, 0.0
        %v784 = vmax.f32 %v752, 0.0
        %v785 = vmax.f32 %v753, 0.0
        %v786 = vmax.f32 %v754, 0.0
        %v787 = vmax.f32 %v755, 0.0
        %v788 = vmax.f32 %v756, 0.0
        %v789 = vmax.f32 %v757, 0.0
        %v790 = vmax.f32 %v758, 0.0
        %v791 = vmax.f32 %v759, 0.0
        %v792 = vmax.f32 %v760, 0.0
        %v793 = vmax.f32 %v761, 0.0
        %v794 = vmax.f32 %v762, 0.0
        %v795 = vmax.f32 %v763, 0.0
        %v796 = vmax.f32 %v764, 0.0
        %v797 = vmax.f32 %v765, 0.0
        %v798 = vmax.f32 %v766, 0.0
        %v799 = vmax.f32 %v767, 0.0
        %v800 = vmax.f32 %v768, 0.0
        %v801 = vmax.f32 %v769, 0.0
        %v802 = vmax.f32 %v770, 0.0
        %v803 = vmax.f32 %v771, 0.0
        %v804 = vmax.f32 %v772, 0.0
        %v805 = vmax.f32 %v773, 0.0
        %v806 = vmax.f32 %v774, 0.0
        %v807 = vmax.f32 %v775, 0.0
        %v808 = vmax.f32 %v776, 0.0
        %v809 = vmax.f32 %v777, 0.0
        %v810 = vmax.f32 %v778, 0.0
        %v811 = vmax.f32 %v779, 0.0
        %v812 = vmax.f32 %v780, 0.0
        %v813 = vmax.f32 %v781, 0.0
        %v814 = vmax.f32 %v782, 0.0
        %vm815 = vcmask 64512
        %816 = vst.msk [vmem:[#allocation2] sm:$0xff] %vm815, 0.0
        %817 = vst.msk [vmem:[#allocation2 + $0x8] sm:$0xff] %vm815, 0.0
        %vm818 = vcmask 58368
        %819 = vst.msk [vmem:[#allocation2 + $0x10] sm:$0x3] %vm818, 0.0
        %820 = vst.msk [vmem:[#allocation2 + $0x18] sm:$0xff] %vm815, 0.0
        %821 = vst.msk [vmem:[#allocation2 + $0x20] sm:$0xff] %vm815, 0.0
        %822 = vst.msk [vmem:[#allocation2 + $0x28] sm:$0x3] %vm818, 0.0
        %823 = vst.msk [vmem:[#allocation2 + $0x30] sm:$0xff] %vm815, 0.0
        %824 = vst.msk [vmem:[#allocation2 + $0x38] sm:$0xff] %vm815, 0.0
        %825 = vst.msk [vmem:[#allocation2 + $0x40] sm:$0x3] %vm818, 0.0
        %826 = vst.msk [vmem:[#allocation2 + $0x48] sm:$0xff] %vm815, 0.0
        %827 = vst.msk [vmem:[#allocation2 + $0x50] sm:$0xff] %vm815, 0.0
        %828 = vst.msk [vmem:[#allocation2 + $0x58] sm:$0x3] %vm818, 0.0
        %829 = vst.msk [vmem:[#allocation2 + $0x60] sm:$0xff] %vm815, 0.0
        %830 = vst.msk [vmem:[#allocation2 + $0x68] sm:$0xff] %vm815, 0.0
        %831 = vst.msk [vmem:[#allocation2 + $0x70] sm:$0x3] %vm818, 0.0
        %832 = vst.msk [vmem:[#allocation2 + $0x78] sm:$0xff] %vm815, 0.0
        %833 = vst.msk [vmem:[#allocation2 + $0x80] sm:$0xff] %vm815, 0.0
        %834 = vst.msk [vmem:[#allocation2 + $0x88] sm:$0x3] %vm818, 0.0
        %835 = vst.msk [vmem:[#allocation2 + $0x90] sm:$0xff] %vm815, 0.0
        %836 = vst.msk [vmem:[#allocation2 + $0x98] sm:$0xff] %vm815, 0.0
        %837 = vst.msk [vmem:[#allocation2 + $0xa0] sm:$0x3] %vm818, 0.0
        %838 = vst.msk [vmem:[#allocation2 + $0xa8] sm:$0xff] %vm815, 0.0
        %839 = vst.msk [vmem:[#allocation2 + $0xb0] sm:$0xff] %vm815, 0.0
        %840 = vst.msk [vmem:[#allocation2 + $0xb8] sm:$0x3] %vm818, 0.0
        %841 = vst.msk [vmem:[#allocation2 + $0xc0] sm:$0xff] %vm815, 0.0
        %842 = vst.msk [vmem:[#allocation2 + $0xc8] sm:$0xff] %vm815, 0.0
        %843 = vst.msk [vmem:[#allocation2 + $0xd0] sm:$0x3] %vm818, 0.0
        %844 = vst.msk [vmem:[#allocation2 + $0xd8] sm:$0xff] %vm815, 0.0
        %845 = vst.msk [vmem:[#allocation2 + $0xe0] sm:$0xff] %vm815, 0.0
        %846 = vst.msk [vmem:[#allocation2 + $0xe8] sm:$0x3] %vm818, 0.0
        %847 = vst.msk [vmem:[#allocation2 + $0xf0] sm:$0xff] %vm815, 0.0
        %848 = vst.msk [vmem:[#allocation2 + $0xf8] sm:$0xff] %vm815, 0.0
        %849 = vst.msk [vmem:[#allocation2 + $0x100] sm:$0x3] %vm818, 0.0
        %850 = vst.msk [vmem:[#allocation2 + $0x108] sm:$0xff] %vm815, 0.0
        %851 = vst.msk [vmem:[#allocation2 + $0x110] sm:$0xff] %vm815, 0.0
        %852 = vst.msk [vmem:[#allocation2 + $0x118] sm:$0x3] %vm818, 0.0
        %853 = vst.msk [vmem:[#allocation2 + $0x120] sm:$0xff] %vm815, 0.0
        %854 = vst.msk [vmem:[#allocation2 + $0x128] sm:$0xff] %vm815, 0.0
        %855 = vst.msk [vmem:[#allocation2 + $0x130] sm:$0x3] %vm818, 0.0
        %856 = vst.msk [vmem:[#allocation2 + $0x138] sm:$0xff] %vm815, 0.0
        %857 = vst.msk [vmem:[#allocation2 + $0x140] sm:$0xff] %vm815, 0.0
        %858 = vst.msk [vmem:[#allocation2 + $0x148] sm:$0x3] %vm818, 0.0
        %859 = vst.msk [vmem:[#allocation2 + $0x150] sm:$0xff] %vm815, 0.0
        %860 = vst.msk [vmem:[#allocation2 + $0x158] sm:$0xff] %vm815, 0.0
        %861 = vst.msk [vmem:[#allocation2 + $0x160] sm:$0x3] %vm818, 0.0
        %862 = vst.msk [vmem:[#allocation2 + $0x168] sm:$0xff] %vm815, 0.0
        %863 = vst.msk [vmem:[#allocation2 + $0x170] sm:$0xff] %vm815, 0.0
        %864 = vst.msk [vmem:[#allocation2 + $0x178] sm:$0x3] %vm818, 0.0
        %865 = vst.msk [vmem:[#allocation2 + $0x180] sm:$0xff] %vm815, 0.0
        %866 = vst.msk [vmem:[#allocation2 + $0x188] sm:$0xff] %vm815, 0.0
        %867 = vst.msk [vmem:[#allocation2 + $0x190] sm:$0x3] %vm818, 0.0
        %868 = vst.msk [vmem:[#allocation2 + $0x198] sm:$0xff] %vm815, 0.0
        %869 = vst.msk [vmem:[#allocation2 + $0x1a0] sm:$0xff] %vm815, 0.0
        %870 = vst.msk [vmem:[#allocation2 + $0x1a8] sm:$0x3] %vm818, 0.0
        %s871 = scalar_lea.vmem [#allocation2], 24
        %872 = vst.msk [vmem:[%s871 + $0x1] sm:$0xff] %vm815, %v783
        %873 = vst.msk [vmem:[%s871 + $0x9] sm:$0xff] %vm815, %v784
        %874 = vst.msk [vmem:[%s871 + $0x19] sm:$0xff] %vm815, %v785
        %875 = vst.msk [vmem:[%s871 + $0x21] sm:$0xff] %vm815, %v786
        %876 = vst.msk [vmem:[%s871 + $0x31] sm:$0xff] %vm815, %v787
        %877 = vst.msk [vmem:[%s871 + $0x39] sm:$0xff] %vm815, %v788
        %878 = vst.msk [vmem:[%s871 + $0x49] sm:$0xff] %vm815, %v789
        %879 = vst.msk [vmem:[%s871 + $0x51] sm:$0xff] %vm815, %v790
        %880 = vst.msk [vmem:[%s871 + $0x61] sm:$0xff] %vm815, %v791
        %881 = vst.msk [vmem:[%s871 + $0x69] sm:$0xff] %vm815, %v792
        %882 = vst.msk [vmem:[%s871 + $0x79] sm:$0xff] %vm815, %v793
        %883 = vst.msk [vmem:[%s871 + $0x81] sm:$0xff] %vm815, %v794
        %884 = vst.msk [vmem:[%s871 + $0x91] sm:$0xff] %vm815, %v795
        %885 = vst.msk [vmem:[%s871 + $0x99] sm:$0xff] %vm815, %v796
        %886 = vst.msk [vmem:[%s871 + $0xa9] sm:$0xff] %vm815, %v797
        %887 = vst.msk [vmem:[%s871 + $0xb1] sm:$0xff] %vm815, %v798
        %888 = vst.msk [vmem:[%s871 + $0xc1] sm:$0xff] %vm815, %v799
        %889 = vst.msk [vmem:[%s871 + $0xc9] sm:$0xff] %vm815, %v800
        %890 = vst.msk [vmem:[%s871 + $0xd9] sm:$0xff] %vm815, %v801
        %891 = vst.msk [vmem:[%s871 + $0xe1] sm:$0xff] %vm815, %v802
        %892 = vst.msk [vmem:[%s871 + $0xf1] sm:$0xff] %vm815, %v803
        %893 = vst.msk [vmem:[%s871 + $0xf9] sm:$0xff] %vm815, %v804
        %894 = vst.msk [vmem:[%s871 + $0x109] sm:$0xff] %vm815, %v805
        %895 = vst.msk [vmem:[%s871 + $0x111] sm:$0xff] %vm815, %v806
        %896 = vst.msk [vmem:[%s871 + $0x121] sm:$0xff] %vm815, %v807
        %897 = vst.msk [vmem:[%s871 + $0x129] sm:$0xff] %vm815, %v808
        %898 = vst.msk [vmem:[%s871 + $0x139] sm:$0xff] %vm815, %v809
        %899 = vst.msk [vmem:[%s871 + $0x141] sm:$0xff] %vm815, %v810
        %900 = vst.msk [vmem:[%s871 + $0x151] sm:$0xff] %vm815, %v811
        %901 = vst.msk [vmem:[%s871 + $0x159] sm:$0xff] %vm815, %v812
        %902 = vst.msk [vmem:[%s871 + $0x169] sm:$0xff] %vm815, %v813
        %903 = vst.msk [vmem:[%s871 + $0x171] sm:$0xff] %vm815, %v814
        %v904 = vld [vmem:[#allocation2] ss:$2 sm:$0xff]
        %s905 = scalar_lea.vmem [#allocation2], 48
        %v906 = vld [vmem:[%s905] ss:$2 sm:$0xff]
        %s907 = scalar_lea.vmem [#allocation2], 96
        %v908 = vld [vmem:[%s907] ss:$2 sm:$0xff]
        %s909 = scalar_lea.vmem [#allocation2], 144
        %v910 = vld [vmem:[%s909] ss:$2 sm:$0xff]
        %s911 = scalar_lea.vmem [#allocation2], 192
        %v912 = vld [vmem:[%s911] ss:$2 sm:$0xff]
        %s913 = scalar_lea.vmem [#allocation2], 240
        %v914 = vld [vmem:[%s913] ss:$2 sm:$0xff]
        %s915 = scalar_lea.vmem [#allocation2], 288
        %v916 = vld [vmem:[%s915] ss:$2 sm:$0xff]
        %s917 = scalar_lea.vmem [#allocation2], 336
        %v918 = vld [vmem:[%s917] ss:$2 sm:$0xff]
        %v919 = vld [vmem:[%s3] sm:$0x1]
        %v920 = vlaneseq
        %v921 = vshrl.u32 %v920, 7
        %v922 = vsub.s32 0, %v921
        %v923 = vrot.slane %v919, %v922
        %v924 = vmul.f32 %v904, %v923
        %v925 = vmul.f32 %v906, %v923
        %v926 = vmul.f32 %v908, %v923
        %v927 = vmul.f32 %v910, %v923
        %v928 = vmul.f32 %v912, %v923
        %v929 = vmul.f32 %v914, %v923
        %v930 = vmul.f32 %v916, %v923
        %v931 = vmul.f32 %v918, %v923
        %s932 = scalar_lea.vmem [#allocation2], 1
        %v933 = vld [vmem:[%s932] ss:$2 sm:$0xff]
        %s934 = scalar_lea.vmem [#allocation2], 49
        %v935 = vld [vmem:[%s934] ss:$2 sm:$0xff]
        %s936 = scalar_lea.vmem [#allocation2], 97
        %v937 = vld [vmem:[%s936] ss:$2 sm:$0xff]
        %s938 = scalar_lea.vmem [#allocation2], 145
        %v939 = vld [vmem:[%s938] ss:$2 sm:$0xff]
        %s940 = scalar_lea.vmem [#allocation2], 193
        %v941 = vld [vmem:[%s940] ss:$2 sm:$0xff]
        %s942 = scalar_lea.vmem [#allocation2], 241
        %v943 = vld [vmem:[%s942] ss:$2 sm:$0xff]
        %s944 = scalar_lea.vmem [#allocation2], 289
        %v945 = vld [vmem:[%s944] ss:$2 sm:$0xff]
        %s946 = scalar_lea.vmem [#allocation2], 337
        %v947 = vld [vmem:[%s946] ss:$2 sm:$0xff]
        %v948 = vld [vmem:[%s3 + $0x1] sm:$0x1]
        %v949 = vlaneseq
        %v950 = vshrl.u32 %v949, 7
        %v951 = vsub.s32 0, %v950
        %v952 = vrot.slane %v948, %v951
        %v953 = vmul.f32 %v933, %v952
        %v954 = vmul.f32 %v935, %v952
        %v955 = vmul.f32 %v937, %v952
        %v956 = vmul.f32 %v939, %v952
        %v957 = vmul.f32 %v941, %v952
        %v958 = vmul.f32 %v943, %v952
        %v959 = vmul.f32 %v945, %v952
        %v960 = vmul.f32 %v947, %v952
        %v961 = vadd.f32 %v924, %v953
        %v962 = vadd.f32 %v925, %v954
        %v963 = vadd.f32 %v926, %v955
        %v964 = vadd.f32 %v927, %v956
        %v965 = vadd.f32 %v928, %v957
        %v966 = vadd.f32 %v929, %v958
        %v967 = vadd.f32 %v930, %v959
        %v968 = vadd.f32 %v931, %v960
        %s969 = scalar_lea.vmem [#allocation2], 2
        %v970 = vld [vmem:[%s969] ss:$2 sm:$0xff]
        %s971 = scalar_lea.vmem [#allocation2], 50
        %v972 = vld [vmem:[%s971] ss:$2 sm:$0xff]
        %s973 = scalar_lea.vmem [#allocation2], 98
        %v974 = vld [vmem:[%s973] ss:$2 sm:$0xff]
        %s975 = scalar_lea.vmem [#allocation2], 146
        %v976 = vld [vmem:[%s975] ss:$2 sm:$0xff]
        %s977 = scalar_lea.vmem [#allocation2], 194
        %v978 = vld [vmem:[%s977] ss:$2 sm:$0xff]
        %s979 = scalar_lea.vmem [#allocation2], 242
        %v980 = vld [vmem:[%s979] ss:$2 sm:$0xff]
        %s981 = scalar_lea.vmem [#allocation2], 290
        %v982 = vld [vmem:[%s981] ss:$2 sm:$0xff]
        %s983 = scalar_lea.vmem [#allocation2], 338
        %v984 = vld [vmem:[%s983] ss:$2 sm:$0xff]
        %v985 = vld [vmem:[%s3 + $0x2] sm:$0x1]
        %v986 = vlaneseq
        %v987 = vshrl.u32 %v986, 7
        %v988 = vsub.s32 0, %v987
        %v989 = vrot.slane %v985, %v988
        %v990 = vmul.f32 %v970, %v989
        %v991 = vmul.f32 %v972, %v989
        %v992 = vmul.f32 %v974, %v989
        %v993 = vmul.f32 %v976, %v989
        %v994 = vmul.f32 %v978, %v989
        %v995 = vmul.f32 %v980, %v989
        %v996 = vmul.f32 %v982, %v989
        %v997 = vmul.f32 %v984, %v989
        %v998 = vadd.f32 %v961, %v990
        %v999 = vadd.f32 %v962, %v991
        %v1000 = vadd.f32 %v963, %v992
        %v1001 = vadd.f32 %v964, %v993
        %v1002 = vadd.f32 %v965, %v994
        %v1003 = vadd.f32 %v966, %v995
        %v1004 = vadd.f32 %v967, %v996
        %v1005 = vadd.f32 %v968, %v997
        %v1006 = vld [vmem:[%s871] ss:$2 sm:$0xff]
        %s1007 = scalar_lea.vmem %s871, 48 [#allocation2]
        %v1008 = vld [vmem:[%s1007] ss:$2 sm:$0xff]
        %s1009 = scalar_lea.vmem %s871, 96 [#allocation2]
        %v1010 = vld [vmem:[%s1009] ss:$2 sm:$0xff]
        %s1011 = scalar_lea.vmem %s871, 144 [#allocation2]
        %v1012 = vld [vmem:[%s1011] ss:$2 sm:$0xff]
        %s1013 = scalar_lea.vmem %s871, 192 [#allocation2]
        %v1014 = vld [vmem:[%s1013] ss:$2 sm:$0xff]
        %s1015 = scalar_lea.vmem %s871, 240 [#allocation2]
        %v1016 = vld [vmem:[%s1015] ss:$2 sm:$0xff]
        %s1017 = scalar_lea.vmem %s871, 288 [#allocation2]
        %v1018 = vld [vmem:[%s1017] ss:$2 sm:$0xff]
        %s1019 = scalar_lea.vmem %s871, 336 [#allocation2]
        %v1020 = vld [vmem:[%s1019] ss:$2 sm:$0xff]
        %v1021 = vld [vmem:[%s3 + $0x3] sm:$0x1]
        %v1022 = vlaneseq
        %v1023 = vshrl.u32 %v1022, 7
        %v1024 = vsub.s32 0, %v1023
        %v1025 = vrot.slane %v1021, %v1024
        %v1026 = vmul.f32 %v1006, %v1025
        %v1027 = vmul.f32 %v1008, %v1025
        %v1028 = vmul.f32 %v1010, %v1025
        %v1029 = vmul.f32 %v1012, %v1025
        %v1030 = vmul.f32 %v1014, %v1025
        %v1031 = vmul.f32 %v1016, %v1025
        %v1032 = vmul.f32 %v1018, %v1025
        %v1033 = vmul.f32 %v1020, %v1025
        %v1034 = vadd.f32 %v998, %v1026
        %v1035 = vadd.f32 %v999, %v1027
        %v1036 = vadd.f32 %v1000, %v1028
        %v1037 = vadd.f32 %v1001, %v1029
        %v1038 = vadd.f32 %v1002, %v1030
        %v1039 = vadd.f32 %v1003, %v1031
        %v1040 = vadd.f32 %v1004, %v1032
        %v1041 = vadd.f32 %v1005, %v1033
        %s1042 = scalar_lea.vmem %s871, 1 [#allocation2]
        %v1043 = vld [vmem:[%s1042] ss:$2 sm:$0xff]
        %s1044 = scalar_lea.vmem %s871, 49 [#allocation2]
        %v1045 = vld [vmem:[%s1044] ss:$2 sm:$0xff]
        %s1046 = scalar_lea.vmem %s871, 97 [#allocation2]
        %v1047 = vld [vmem:[%s1046] ss:$2 sm:$0xff]
        %s1048 = scalar_lea.vmem %s871, 145 [#allocation2]
        %v1049 = vld [vmem:[%s1048] ss:$2 sm:$0xff]
        %s1050 = scalar_lea.vmem %s871, 193 [#allocation2]
        %v1051 = vld [vmem:[%s1050] ss:$2 sm:$0xff]
        %s1052 = scalar_lea.vmem %s871, 241 [#allocation2]
        %v1053 = vld [vmem:[%s1052] ss:$2 sm:$0xff]
        %s1054 = scalar_lea.vmem %s871, 289 [#allocation2]
        %v1055 = vld [vmem:[%s1054] ss:$2 sm:$0xff]
        %s1056 = scalar_lea.vmem %s871, 337 [#allocation2]
        %v1057 = vld [vmem:[%s1056] ss:$2 sm:$0xff]
        %v1058 = vld [vmem:[%s3 + $0x4] sm:$0x1]
        %v1059 = vlaneseq
        %v1060 = vshrl.u32 %v1059, 7
        %v1061 = vsub.s32 0, %v1060
        %v1062 = vrot.slane %v1058, %v1061
        %v1063 = vmul.f32 %v1043, %v1062
        %v1064 = vmul.f32 %v1045, %v1062
        %v1065 = vmul.f32 %v1047, %v1062
        %v1066 = vmul.f32 %v1049, %v1062
        %v1067 = vmul.f32 %v1051, %v1062
        %v1068 = vmul.f32 %v1053, %v1062
        %v1069 = vmul.f32 %v1055, %v1062
        %v1070 = vmul.f32 %v1057, %v1062
        %v1071 = vadd.f32 %v1034, %v1063
        %v1072 = vadd.f32 %v1035, %v1064
        %v1073 = vadd.f32 %v1036, %v1065
        %v1074 = vadd.f32 %v1037, %v1066
        %v1075 = vadd.f32 %v1038, %v1067
        %v1076 = vadd.f32 %v1039, %v1068
        %v1077 = vadd.f32 %v1040, %v1069
        %v1078 = vadd.f32 %v1041, %v1070
        %s1079 = scalar_lea.vmem %s871, 2 [#allocation2]
        %v1080 = vld [vmem:[%s1079] ss:$2 sm:$0xff]
        %s1081 = scalar_lea.vmem %s871, 50 [#allocation2]
        %v1082 = vld [vmem:[%s1081] ss:$2 sm:$0xff]
        %s1083 = scalar_lea.vmem %s871, 98 [#allocation2]
        %v1084 = vld [vmem:[%s1083] ss:$2 sm:$0xff]
        %s1085 = scalar_lea.vmem %s871, 146 [#allocation2]
        %v1086 = vld [vmem:[%s1085] ss:$2 sm:$0xff]
        %s1087 = scalar_lea.vmem %s871, 194 [#allocation2]
        %v1088 = vld [vmem:[%s1087] ss:$2 sm:$0xff]
        %s1089 = scalar_lea.vmem %s871, 242 [#allocation2]
        %v1090 = vld [vmem:[%s1089] ss:$2 sm:$0xff]
        %s1091 = scalar_lea.vmem %s871, 290 [#allocation2]
        %v1092 = vld [vmem:[%s1091] ss:$2 sm:$0xff]
        %s1093 = scalar_lea.vmem %s871, 338 [#allocation2]
        %v1094 = vld [vmem:[%s1093] ss:$2 sm:$0xff]
        %v1095 = vld [vmem:[%s3 + $0x5] sm:$0x1]
        %v1096 = vlaneseq
        %v1097 = vshrl.u32 %v1096, 7
        %v1098 = vsub.s32 0, %v1097
        %v1099 = vrot.slane %v1095, %v1098
        %v1100 = vmul.f32 %v1080, %v1099
        %v1101 = vmul.f32 %v1082, %v1099
        %v1102 = vmul.f32 %v1084, %v1099
        %v1103 = vmul.f32 %v1086, %v1099
        %v1104 = vmul.f32 %v1088, %v1099
        %v1105 = vmul.f32 %v1090, %v1099
        %v1106 = vmul.f32 %v1092, %v1099
        %v1107 = vmul.f32 %v1094, %v1099
        %v1108 = vadd.f32 %v1071, %v1100
        %v1109 = vadd.f32 %v1072, %v1101
        %v1110 = vadd.f32 %v1073, %v1102
        %v1111 = vadd.f32 %v1074, %v1103
        %v1112 = vadd.f32 %v1075, %v1104
        %v1113 = vadd.f32 %v1076, %v1105
        %v1114 = vadd.f32 %v1077, %v1106
        %v1115 = vadd.f32 %v1078, %v1107
        %s1116 = scalar_lea.vmem [#allocation2], 48
        %v1117 = vld [vmem:[%s1116] ss:$2 sm:$0xff]
        %s1118 = scalar_lea.vmem %s1116, 48 [#allocation2]
        %v1119 = vld [vmem:[%s1118] ss:$2 sm:$0xff]
        %s1120 = scalar_lea.vmem %s1116, 96 [#allocation2]
        %v1121 = vld [vmem:[%s1120] ss:$2 sm:$0xff]
        %s1122 = scalar_lea.vmem %s1116, 144 [#allocation2]
        %v1123 = vld [vmem:[%s1122] ss:$2 sm:$0xff]
        %s1124 = scalar_lea.vmem %s1116, 192 [#allocation2]
        %v1125 = vld [vmem:[%s1124] ss:$2 sm:$0xff]
        %s1126 = scalar_lea.vmem %s1116, 240 [#allocation2]
        %v1127 = vld [vmem:[%s1126] ss:$2 sm:$0xff]
        %s1128 = scalar_lea.vmem %s1116, 288 [#allocation2]
        %v1129 = vld [vmem:[%s1128] ss:$2 sm:$0xff]
        %s1130 = scalar_lea.vmem %s1116, 336 [#allocation2]
        %v1131 = vld [vmem:[%s1130] ss:$2 sm:$0xff]
        %v1132 = vld [vmem:[%s3 + $0x6] sm:$0x1]
        %v1133 = vlaneseq
        %v1134 = vshrl.u32 %v1133, 7
        %v1135 = vsub.s32 0, %v1134
        %v1136 = vrot.slane %v1132, %v1135
        %v1137 = vmul.f32 %v1117, %v1136
        %v1138 = vmul.f32 %v1119, %v1136
        %v1139 = vmul.f32 %v1121, %v1136
        %v1140 = vmul.f32 %v1123, %v1136
        %v1141 = vmul.f32 %v1125, %v1136
        %v1142 = vmul.f32 %v1127, %v1136
        %v1143 = vmul.f32 %v1129, %v1136
        %v1144 = vmul.f32 %v1131, %v1136
        %v1145 = vadd.f32 %v1108, %v1137
        %v1146 = vadd.f32 %v1109, %v1138
        %v1147 = vadd.f32 %v1110, %v1139
        %v1148 = vadd.f32 %v1111, %v1140
        %v1149 = vadd.f32 %v1112, %v1141
        %v1150 = vadd.f32 %v1113, %v1142
        %v1151 = vadd.f32 %v1114, %v1143
        %v1152 = vadd.f32 %v1115, %v1144
        %s1153 = scalar_lea.vmem %s1116, 1 [#allocation2]
        %v1154 = vld [vmem:[%s1153] ss:$2 sm:$0xff]
        %s1155 = scalar_lea.vmem %s1116, 49 [#allocation2]
        %v1156 = vld [vmem:[%s1155] ss:$2 sm:$0xff]
        %s1157 = scalar_lea.vmem %s1116, 97 [#allocation2]
        %v1158 = vld [vmem:[%s1157] ss:$2 sm:$0xff]
        %s1159 = scalar_lea.vmem %s1116, 145 [#allocation2]
        %v1160 = vld [vmem:[%s1159] ss:$2 sm:$0xff]
        %s1161 = scalar_lea.vmem %s1116, 193 [#allocation2]
        %v1162 = vld [vmem:[%s1161] ss:$2 sm:$0xff]
        %s1163 = scalar_lea.vmem %s1116, 241 [#allocation2]
        %v1164 = vld [vmem:[%s1163] ss:$2 sm:$0xff]
        %s1165 = scalar_lea.vmem %s1116, 289 [#allocation2]
        %v1166 = vld [vmem:[%s1165] ss:$2 sm:$0xff]
        %s1167 = scalar_lea.vmem %s1116, 337 [#allocation2]
        %v1168 = vld [vmem:[%s1167] ss:$2 sm:$0xff]
        %v1169 = vld [vmem:[%s3 + $0x7] sm:$0x1]
        %v1170 = vlaneseq
        %v1171 = vshrl.u32 %v1170, 7
        %v1172 = vsub.s32 0, %v1171
        %v1173 = vrot.slane %v1169, %v1172
        %v1174 = vmul.f32 %v1154, %v1173
        %v1175 = vmul.f32 %v1156, %v1173
        %v1176 = vmul.f32 %v1158, %v1173
        %v1177 = vmul.f32 %v1160, %v1173
        %v1178 = vmul.f32 %v1162, %v1173
        %v1179 = vmul.f32 %v1164, %v1173
        %v1180 = vmul.f32 %v1166, %v1173
        %v1181 = vmul.f32 %v1168, %v1173
        %v1182 = vadd.f32 %v1145, %v1174
        %v1183 = vadd.f32 %v1146, %v1175
        %v1184 = vadd.f32 %v1147, %v1176
        %v1185 = vadd.f32 %v1148, %v1177
        %v1186 = vadd.f32 %v1149, %v1178
        %v1187 = vadd.f32 %v1150, %v1179
        %v1188 = vadd.f32 %v1151, %v1180
        %v1189 = vadd.f32 %v1152, %v1181
        %s1190 = scalar_lea.vmem %s1116, 2 [#allocation2]
        %v1191 = vld [vmem:[%s1190] ss:$2 sm:$0xff]
        %s1192 = scalar_lea.vmem %s1116, 50 [#allocation2]
        %v1193 = vld [vmem:[%s1192] ss:$2 sm:$0xff]
        %s1194 = scalar_lea.vmem %s1116, 98 [#allocation2]
        %v1195 = vld [vmem:[%s1194] ss:$2 sm:$0xff]
        %s1196 = scalar_lea.vmem %s1116, 146 [#allocation2]
        %v1197 = vld [vmem:[%s1196] ss:$2 sm:$0xff]
        %s1198 = scalar_lea.vmem %s1116, 194 [#allocation2]
        %v1199 = vld [vmem:[%s1198] ss:$2 sm:$0xff]
        %s1200 = scalar_lea.vmem %s1116, 242 [#allocation2]
        %v1201 = vld [vmem:[%s1200] ss:$2 sm:$0xff]
        %s1202 = scalar_lea.vmem %s1116, 290 [#allocation2]
        %v1203 = vld [vmem:[%s1202] ss:$2 sm:$0xff]
        %s1204 = scalar_lea.vmem %s1116, 338 [#allocation2]
        %v1205 = vld [vmem:[%s1204] ss:$2 sm:$0xff]
        %v1206 = vld [vmem:[%s3 + $0x8] sm:$0x1]
        %v1207 = vlaneseq
        %v1208 = vshrl.u32 %v1207, 7
        %v1209 = vsub.s32 0, %v1208
        %v1210 = vrot.slane %v1206, %v1209
        %v1211 = vmul.f32 %v1191, %v1210
        %v1212 = vmul.f32 %v1193, %v1210
        %v1213 = vmul.f32 %v1195, %v1210
        %v1214 = vmul.f32 %v1197, %v1210
        %v1215 = vmul.f32 %v1199, %v1210
        %v1216 = vmul.f32 %v1201, %v1210
        %v1217 = vmul.f32 %v1203, %v1210
        %v1218 = vmul.f32 %v1205, %v1210
        %v1219 = vadd.f32 %v1182, %v1211
        %v1220 = vadd.f32 %v1183, %v1212
        %v1221 = vadd.f32 %v1184, %v1213
        %v1222 = vadd.f32 %v1185, %v1214
        %v1223 = vadd.f32 %v1186, %v1215
        %v1224 = vadd.f32 %v1187, %v1216
        %v1225 = vadd.f32 %v1188, %v1217
        %v1226 = vadd.f32 %v1189, %v1218
        %v1227 = vld [vmem:[%s4] sm:$0x1]
        %v1228 = vlaneseq
        %v1229 = vshrl.u32 %v1228, 7
        %v1230 = vsub.s32 0, %v1229
        %v1231 = vrot.slane %v1227, %v1230
        %v1232 = vmul.f32 %v1219, %v1231
        %v1233 = vmul.f32 %v1220, %v1231
        %v1234 = vmul.f32 %v1221, %v1231
        %v1235 = vmul.f32 %v1222, %v1231
        %v1236 = vmul.f32 %v1223, %v1231
        %v1237 = vmul.f32 %v1224, %v1231
        %v1238 = vmul.f32 %v1225, %v1231
        %v1239 = vmul.f32 %v1226, %v1231
        %v1240 = vld [vmem:[%s4 + $0x1] sm:$0x1]
        %v1241 = vlaneseq
        %v1242 = vshrl.u32 %v1241, 7
        %v1243 = vsub.s32 0, %v1242
        %v1244 = vrot.slane %v1240, %v1243
        %v1245 = vadd.f32 %v1232, %v1244
        %v1246 = vadd.f32 %v1233, %v1244
        %v1247 = vadd.f32 %v1234, %v1244
        %v1248 = vadd.f32 %v1235, %v1244
        %v1249 = vadd.f32 %v1236, %v1244
        %v1250 = vadd.f32 %v1237, %v1244
        %v1251 = vadd.f32 %v1238, %v1244
        %v1252 = vadd.f32 %v1239, %v1244
        %v1253 = vmax.f32 %v1245, 0.0
        %v1254 = vmax.f32 %v1246, 0.0
        %v1255 = vmax.f32 %v1247, 0.0
        %v1256 = vmax.f32 %v1248, 0.0
        %v1257 = vmax.f32 %v1249, 0.0
        %v1258 = vmax.f32 %v1250, 0.0
        %v1259 = vmax.f32 %v1251, 0.0
        %v1260 = vmax.f32 %v1252, 0.0
        %v1261 = vld [vmem:[%s5] sm:$0xff]
        %v1263 = vsel %vm815, %v1253, 0
        %v1266 = vsel %vm815, %v1254, 0
        %v1269 = vsel %vm815, %v1255, 0
        %v1272 = vsel %vm815, %v1256, 0
        %v1275 = vsel %vm815, %v1257, 0
        %v1278 = vsel %vm815, %v1258, 0
        %v1281 = vsel %vm815, %v1259, 0
        %v1284 = vsel %vm815, %v1260, 0
        %1286 = vmatprep.subr.mxu0 0.0
        %1287 = vmatpush1.msra.mxu0 %v1261
        %1288 = vmatprep.subr.mxu0 0.0
        %1289 = vmatpush1.msra.mxu0 0.0
        %1290 = vmatprep.subr.mxu0 0.0
        %1291 = vmatpush1.msra.mxu0 0.0
        %1292 = vmatprep.subr.mxu0 0.0
        %1293 = vmatpush1.msra.mxu0 0.0
        %1294 = vmatprep.subr.mxu0 0.0
        %1295 = vmatpush1.msra.mxu0 0.0
        %1296 = vmatprep.subr.mxu0 0.0
        %1297 = vmatpush1.msra.mxu0 0.0
        %1298 = vmatprep.subr.mxu0 0.0
        %1299 = vmatpush1.msra.mxu0 0.0
        %1300 = vmatprep.subr.mxu0 0.0
        %1301 = vmatpush1.msra.mxu0 0.0
        %1302 = vmatprep.subr.mxu0 0.0
        %1303 = vmatpush1.msra.mxu0 0.0
        %1304 = vmatprep.subr.mxu0 0.0
        %1305 = vmatpush1.msra.mxu0 0.0
        %1306 = vmatprep.subr.mxu0 0.0
        %1307 = vmatpush1.msra.mxu0 0.0
        %1308 = vmatprep.subr.mxu0 0.0
        %1309 = vmatpush1.msra.mxu0 0.0
        %1310 = vmatprep.subr.mxu0 0.0
        %1311 = vmatpush1.msra.mxu0 0.0
        %1312 = vmatprep.subr.mxu0 0.0
        %1313 = vmatpush1.msra.mxu0 0.0
        %1314 = vmatprep.subr.mxu0 0.0
        %1315 = vmatpush1.msra.mxu0 0.0
        %1316 = vmatprep.subr.mxu0 0.0
        %1317 = vmatpush1.msra.mxu0 0.0
        %1318 = vmatprep.subr.mxu0 0.0
        %1319 = vmatpush1.msra.mxu0 0.0
        %1320 = vmatprep.subr.mxu0 0.0
        %1321 = vmatpush1.msra.mxu0 0.0
        %1322 = vmatprep.subr.mxu0 0.0
        %1323 = vmatpush1.msra.mxu0 0.0
        %1324 = vmatprep.subr.mxu0 0.0
        %1325 = vmatpush1.msra.mxu0 0.0
        %1326 = vmatprep.subr.mxu0 0.0
        %1327 = vmatpush1.msra.mxu0 0.0
        %1328 = vmatprep.subr.mxu0 0.0
        %1329 = vmatpush1.msra.mxu0 0.0
        %1330 = vmatprep.subr.mxu0 0.0
        %1331 = vmatpush1.msra.mxu0 0.0
        %1332 = vmatprep.subr.mxu0 0.0
        %1333 = vmatpush1.msra.mxu0 0.0
        %1334 = vmatprep.subr.mxu0 0.0
        %1335 = vmatpush1.msra.mxu0 0.0
        %1336 = vmatprep.subr.mxu0 0.0
        %1337 = vmatpush1.msra.mxu0 0.0
        %1338 = vmatprep.subr.mxu0 0.0
        %1339 = vmatpush1.msra.mxu0 0.0
        %1340 = vmatprep.subr.mxu0 0.0
        %1341 = vmatpush1.msra.mxu0 0.0
        %1342 = vmatprep.subr.mxu0 0.0
        %1343 = vmatpush1.msra.mxu0 0.0
        %1344 = vmatprep.subr.mxu0 0.0
        %1345 = vmatpush1.msra.mxu0 0.0
        %1346 = vmatprep.subr.mxu0 0.0
        %1347 = vmatpush1.msra.mxu0 0.0
        %1348 = vmatprep.subr.mxu0 0.0
        %1349 = vmatpush1.msra.mxu0 0.0
        %1350 = vmatprep.mubr.f32.mxu0 0.0
        %1351 = vmatmul.mubr.f32.gmra.mrb[0].mxu0 %v1263
        %v1352 = vpop.f32.mrb[0].mxu0
        %v1353 = vadd.f32 0.0, %v1352
        %v1354 = vpop.f32.mrb[0].mxu0
        %1355 = vmatprep.mubr.f32.mxu0 0.0
        %1356 = vmatmul.mubr.f32.gmra.mrb[0].mxu0 %v1266
        %v1357 = vpop.f32.mrb[0].mxu0
        %v1358 = vadd.f32 0.0, %v1357
        %v1359 = vpop.f32.mrb[0].mxu0
        %1360 = vmatprep.mubr.f32.mxu0 0.0
        %1361 = vmatmul.mubr.f32.gmra.mrb[0].mxu0 %v1269
        %v1362 = vpop.f32.mrb[0].mxu0
        %v1363 = vadd.f32 0.0, %v1362
        %v1364 = vpop.f32.mrb[0].mxu0
        %1365 = vmatprep.mubr.f32.mxu0 0.0
        %1366 = vmatmul.mubr.f32.gmra.mrb[0].mxu0 %v1272
        %v1367 = vpop.f32.mrb[0].mxu0
        %v1368 = vadd.f32 0.0, %v1367
        %v1369 = vpop.f32.mrb[0].mxu0
        %1370 = vmatprep.mubr.f32.mxu0 0.0
        %1371 = vmatmul.mubr.f32.gmra.mrb[0].mxu0 %v1275
        %v1372 = vpop.f32.mrb[0].mxu0
        %v1373 = vadd.f32 0.0, %v1372
        %v1374 = vpop.f32.mrb[0].mxu0
        %1375 = vmatprep.mubr.f32.mxu0 0.0
        %1376 = vmatmul.mubr.f32.gmra.mrb[0].mxu0 %v1278
        %v1377 = vpop.f32.mrb[0].mxu0
        %v1378 = vadd.f32 0.0, %v1377
        %v1379 = vpop.f32.mrb[0].mxu0
        %1380 = vmatprep.mubr.f32.mxu0 0.0
        %1381 = vmatmul.mubr.f32.gmra.mrb[0].mxu0 %v1281
        %v1382 = vpop.f32.mrb[0].mxu0
        %v1383 = vadd.f32 0.0, %v1382
        %v1384 = vpop.f32.mrb[0].mxu0
        %1385 = vmatprep.mubr.f32.mxu0 0.0
        %1386 = vmatmul.mubr.f32.gmra.mrb[0].mxu0 %v1284
        %v1387 = vpop.f32.mrb[0].mxu0
        %v1388 = vadd.f32 0.0, %v1387
        %v1389 = vpop.f32.mrb[0].mxu0
        %1390 = vdwg.mxu0
        %v1391 = vld [vmem:[%s6] sm:$0x1]
        %v1392 = vlaneseq
        %v1393 = vshrl.u32 %v1392, 7
        %v1394 = vsub.s32 0, %v1393
        %v1395 = vrot.slane %v1391, %v1394
        %v1396 = vmul.f32 %v1353, %v1395
        %v1397 = vmul.f32 %v1358, %v1395
        %v1398 = vmul.f32 %v1363, %v1395
        %v1399 = vmul.f32 %v1368, %v1395
        %v1400 = vmul.f32 %v1373, %v1395
        %v1401 = vmul.f32 %v1378, %v1395
        %v1402 = vmul.f32 %v1383, %v1395
        %v1403 = vmul.f32 %v1388, %v1395
        %v1404 = vld [vmem:[%s6 + $0x1] sm:$0x1]
        %v1405 = vlaneseq
        %v1406 = vshrl.u32 %v1405, 7
        %v1407 = vsub.s32 0, %v1406
        %v1408 = vrot.slane %v1404, %v1407
        %v1409 = vadd.f32 %v1396, %v1408
        %v1410 = vadd.f32 %v1397, %v1408
        %v1411 = vadd.f32 %v1398, %v1408
        %v1412 = vadd.f32 %v1399, %v1408
        %v1413 = vadd.f32 %v1400, %v1408
        %v1414 = vadd.f32 %v1401, %v1408
        %v1415 = vadd.f32 %v1402, %v1408
        %v1416 = vadd.f32 %v1403, %v1408
        %v1417 = vld [vmem:[%s313] ss:$2 sm:$0xff]
        %s1418 = scalar_lea.vmem %s313, 32 [#allocation3]
        %v1419 = vld [vmem:[%s1418] ss:$2 sm:$0xff]
        %s1420 = scalar_lea.vmem %s313, 64 [#allocation3]
        %v1421 = vld [vmem:[%s1420] ss:$2 sm:$0xff]
        %s1422 = scalar_lea.vmem %s313, 96 [#allocation3]
        %v1423 = vld [vmem:[%s1422] ss:$2 sm:$0xff]
        %s1424 = scalar_lea.vmem %s313, 128 [#allocation3]
        %v1425 = vld [vmem:[%s1424] ss:$2 sm:$0xff]
        %s1426 = scalar_lea.vmem %s313, 160 [#allocation3]
        %v1427 = vld [vmem:[%s1426] ss:$2 sm:$0xff]
        %s1428 = scalar_lea.vmem %s313, 192 [#allocation3]
        %v1429 = vld [vmem:[%s1428] ss:$2 sm:$0xff]
        %s1430 = scalar_lea.vmem %s313, 224 [#allocation3]
        %v1431 = vld [vmem:[%s1430] ss:$2 sm:$0xff]
        %v1432 = vld [vmem:[%s7] sm:$0xff]
        %v1433 = vld [vmem:[%s7 + $0x8] sm:$0xff]
        %v1435 = vsel %vm387, %v1417, 0
        %v1438 = vsel %vm387, %v1419, 0
        %v1441 = vsel %vm387, %v1421, 0
        %v1444 = vsel %vm387, %v1423, 0
        %v1447 = vsel %vm387, %v1425, 0
        %v1450 = vsel %vm387, %v1427, 0
        %v1453 = vsel %vm387, %v1429, 0
        %v1456 = vsel %vm387, %v1431, 0
        %1458 = vmatprep.subr.mxu0 0.0
        %1459 = vmatpush1.msra.mxu0 %v1432
        %1460 = vmatprep.subr.mxu0 0.0
        %1461 = vmatpush1.msra.mxu0 %v1433
        %1462 = vmatprep.subr.mxu0 0.0
        %1463 = vmatpush1.msra.mxu0 0.0
        %1464 = vmatprep.subr.mxu0 0.0
        %1465 = vmatpush1.msra.mxu0 0.0
        %1466 = vmatprep.subr.mxu0 0.0
        %1467 = vmatpush1.msra.mxu0 0.0
        %1468 = vmatprep.subr.mxu0 0.0
        %1469 = vmatpush1.msra.mxu0 0.0
        %1470 = vmatprep.subr.mxu0 0.0
        %1471 = vmatpush1.msra.mxu0 0.0
        %1472 = vmatprep.subr.mxu0 0.0
        %1473 = vmatpush1.msra.mxu0 0.0
        %1474 = vmatprep.subr.mxu0 0.0
        %1475 = vmatpush1.msra.mxu0 0.0
        %1476 = vmatprep.subr.mxu0 0.0
        %1477 = vmatpush1.msra.mxu0 0.0
        %1478 = vmatprep.subr.mxu0 0.0
        %1479 = vmatpush1.msra.mxu0 0.0
        %1480 = vmatprep.subr.mxu0 0.0
        %1481 = vmatpush1.msra.mxu0 0.0
        %1482 = vmatprep.subr.mxu0 0.0
        %1483 = vmatpush1.msra.mxu0 0.0
        %1484 = vmatprep.subr.mxu0 0.0
        %1485 = vmatpush1.msra.mxu0 0.0
        %1486 = vmatprep.subr.mxu0 0.0
        %1487 = vmatpush1.msra.mxu0 0.0
        %1488 = vmatprep.subr.mxu0 0.0
        %1489 = vmatpush1.msra.mxu0 0.0
        %1490 = vmatprep.subr.mxu0 0.0
        %1491 = vmatpush1.msra.mxu0 0.0
        %1492 = vmatprep.subr.mxu0 0.0
        %1493 = vmatpush1.msra.mxu0 0.0
        %1494 = vmatprep.subr.mxu0 0.0
        %1495 = vmatpush1.msra.mxu0 0.0
        %1496 = vmatprep.subr.mxu0 0.0
        %1497 = vmatpush1.msra.mxu0 0.0
        %1498 = vmatprep.subr.mxu0 0.0
        %1499 = vmatpush1.msra.mxu0 0.0
        %1500 = vmatprep.subr.mxu0 0.0
        %1501 = vmatpush1.msra.mxu0 0.0
        %1502 = vmatprep.subr.mxu0 0.0
        %1503 = vmatpush1.msra.mxu0 0.0
        %1504 = vmatprep.subr.mxu0 0.0
        %1505 = vmatpush1.msra.mxu0 0.0
        %1506 = vmatprep.subr.mxu0 0.0
        %1507 = vmatpush1.msra.mxu0 0.0
        %1508 = vmatprep.subr.mxu0 0.0
        %1509 = vmatpush1.msra.mxu0 0.0
        %1510 = vmatprep.subr.mxu0 0.0
        %1511 = vmatpush1.msra.mxu0 0.0
        %1512 = vmatprep.subr.mxu0 0.0
        %1513 = vmatpush1.msra.mxu0 0.0
        %1514 = vmatprep.subr.mxu0 0.0
        %1515 = vmatpush1.msra.mxu0 0.0
        %1516 = vmatprep.subr.mxu0 0.0
        %1517 = vmatpush1.msra.mxu0 0.0
        %1518 = vmatprep.subr.mxu0 0.0
        %1519 = vmatpush1.msra.mxu0 0.0
        %1520 = vmatprep.subr.mxu0 0.0
        %1521 = vmatpush1.msra.mxu0 0.0
        %1522 = vmatprep.mubr.f32.mxu0 0.0
        %1523 = vmatmul.mubr.f32.gmra.mrb[0].mxu0 %v1435
        %v1524 = vpop.f32.mrb[0].mxu0
        %v1525 = vadd.f32 0.0, %v1524
        %v1526 = vpop.f32.mrb[0].mxu0
        %1527 = vmatprep.mubr.f32.mxu0 0.0
        %1528 = vmatmul.mubr.f32.gmra.mrb[0].mxu0 %v1438
        %v1529 = vpop.f32.mrb[0].mxu0
        %v1530 = vadd.f32 0.0, %v1529
        %v1531 = vpop.f32.mrb[0].mxu0
        %1532 = vmatprep.mubr.f32.mxu0 0.0
        %1533 = vmatmul.mubr.f32.gmra.mrb[0].mxu0 %v1441
        %v1534 = vpop.f32.mrb[0].mxu0
        %v1535 = vadd.f32 0.0, %v1534
        %v1536 = vpop.f32.mrb[0].mxu0
        %1537 = vmatprep.mubr.f32.mxu0 0.0
        %1538 = vmatmul.mubr.f32.gmra.mrb[0].mxu0 %v1444
        %v1539 = vpop.f32.mrb[0].mxu0
        %v1540 = vadd.f32 0.0, %v1539
        %v1541 = vpop.f32.mrb[0].mxu0
        %1542 = vmatprep.mubr.f32.mxu0 0.0
        %1543 = vmatmul.mubr.f32.gmra.mrb[0].mxu0 %v1447
        %v1544 = vpop.f32.mrb[0].mxu0
        %v1545 = vadd.f32 0.0, %v1544
        %v1546 = vpop.f32.mrb[0].mxu0
        %1547 = vmatprep.mubr.f32.mxu0 0.0
        %1548 = vmatmul.mubr.f32.gmra.mrb[0].mxu0 %v1450
        %v1549 = vpop.f32.mrb[0].mxu0
        %v1550 = vadd.f32 0.0, %v1549
        %v1551 = vpop.f32.mrb[0].mxu0
        %1552 = vmatprep.mubr.f32.mxu0 0.0
        %1553 = vmatmul.mubr.f32.gmra.mrb[0].mxu0 %v1453
        %v1554 = vpop.f32.mrb[0].mxu0
        %v1555 = vadd.f32 0.0, %v1554
        %v1556 = vpop.f32.mrb[0].mxu0
        %1557 = vmatprep.mubr.f32.mxu0 0.0
        %1558 = vmatmul.mubr.f32.gmra.mrb[0].mxu0 %v1456
        %v1559 = vpop.f32.mrb[0].mxu0
        %v1560 = vadd.f32 0.0, %v1559
        %v1561 = vpop.f32.mrb[0].mxu0
        %1562 = vdwg.mxu0
        %v1563 = vld [vmem:[%s8] sm:$0x1]
        %v1564 = vlaneseq
        %v1565 = vshrl.u32 %v1564, 7
        %v1566 = vsub.s32 0, %v1565
        %v1567 = vrot.slane %v1563, %v1566
        %v1568 = vmul.f32 %v1525, %v1567
        %v1569 = vmul.f32 %v1530, %v1567
        %v1570 = vmul.f32 %v1535, %v1567
        %v1571 = vmul.f32 %v1540, %v1567
        %v1572 = vmul.f32 %v1545, %v1567
        %v1573 = vmul.f32 %v1550, %v1567
        %v1574 = vmul.f32 %v1555, %v1567
        %v1575 = vmul.f32 %v1560, %v1567
        %v1576 = vld [vmem:[%s8 + $0x1] sm:$0x1]
        %v1577 = vlaneseq
        %v1578 = vshrl.u32 %v1577, 7
        %v1579 = vsub.s32 0, %v1578
        %v1580 = vrot.slane %v1576, %v1579
        %v1581 = vadd.f32 %v1568, %v1580
        %v1582 = vadd.f32 %v1569, %v1580
        %v1583 = vadd.f32 %v1570, %v1580
        %v1584 = vadd.f32 %v1571, %v1580
        %v1585 = vadd.f32 %v1572, %v1580
        %v1586 = vadd.f32 %v1573, %v1580
        %v1587 = vadd.f32 %v1574, %v1580
        %v1588 = vadd.f32 %v1575, %v1580
        %v1589 = vadd.f32 %v1409, %v1581
        %v1590 = vadd.f32 %v1410, %v1582
        %v1591 = vadd.f32 %v1411, %v1583
        %v1592 = vadd.f32 %v1412, %v1584
        %v1593 = vadd.f32 %v1413, %v1585
        %v1594 = vadd.f32 %v1414, %v1586
        %v1595 = vadd.f32 %v1415, %v1587
        %v1596 = vadd.f32 %v1416, %v1588
        %v1597 = vmax.f32 %v1589, 0.0
        %v1598 = vmax.f32 %v1590, 0.0
        %v1599 = vmax.f32 %v1591, 0.0
        %v1600 = vmax.f32 %v1592, 0.0
        %v1601 = vmax.f32 %v1593, 0.0
        %v1602 = vmax.f32 %v1594, 0.0
        %v1603 = vmax.f32 %v1595, 0.0
        %v1604 = vmax.f32 %v1596, 0.0
        %vm1605 = vcmask 261120
        %1606 = vst.msk [vmem:[%s352] sm:$0xff] %vm1605, %v1597
        %1607 = vst.msk [vmem:[%s352 + $0x8] sm:$0xff] %vm1605, %v1598
        %1608 = vst.msk [vmem:[%s352 + $0x10] sm:$0xff] %vm1605, %v1599
        %1609 = vst.msk [vmem:[%s352 + $0x18] sm:$0xff] %vm1605, %v1600
        %1610 = vst.msk [vmem:[%s352 + $0x20] sm:$0xff] %vm1605, %v1601
        %1611 = vst.msk [vmem:[%s352 + $0x28] sm:$0xff] %vm1605, %v1602
        %1612 = vst.msk [vmem:[%s352 + $0x30] sm:$0xff] %vm1605, %v1603
        %1613 = vst.msk [vmem:[%s352 + $0x38] sm:$0xff] %vm1605, %v1604
        %p1614 = scmp.lt.s32.totalorder %s23, 1
        %s1615 = scalar_select %p1614, %s23, 1
        %s1616 = smul.addr %s1615, 8
        %s1617 = smul.addr %s1616, 8
        %s1618 = scalar_lea.vmem %s9, %s1617
        // Predicated region
        $region61: #{tpu_custom_call.1} parent=55 // pred_check
          %p1619 = pneg %p235
        $region62: #{tpu_custom_call.1} parent=55 // pred_check_branch
          %1621 = sbr.rel (%p1619) target = $region64
        $region63: #{tpu_custom_call.1} parent=55 // pred_region
          _
        $region64: #{tpu_custom_call.1} parent=55 // pred_fallthru
          _
      $region56: #{tpu_custom_call.1} parent=5 // pred_fallthru
        _
      %p1622 = scmp.le.s32.totalorder 2, %s18
      // Predicated region
      $region65: #{tpu_custom_call.1} parent=5 // pred_check
        %p1623 = pneg %p1622
      $region66: #{tpu_custom_call.1} parent=5 // pred_check_branch
        %1625 = sbr.rel (%p1623) target = $region68
      $region67: #{tpu_custom_call.1} parent=5 // pred_region
        %s1626 = ssub.s32 %s18, 2
        // Predicated region
        $region69: #{tpu_custom_call.1} parent=67 // pred_check
          %p1627 = pneg %p241
        $region70: #{tpu_custom_call.1} parent=67 // pred_check_branch
          %1629 = sbr.rel (%p1627) target = $region72
        $region71: #{tpu_custom_call.1} parent=67 // pred_region
          %p1630 = scmp.lt.s32.totalorder %s24, 1
          %s1631 = scalar_select %p1630, %s24, 1
          %s1632 = smul.addr %s1631, 8
          %s1633 = smul.addr %s1632, 8
          %s1634 = scalar_lea.vmem %s9, %s1633
        $region72: #{tpu_custom_call.1} parent=67 // pred_fallthru
          _
      $region68: #{tpu_custom_call.1} parent=5 // pred_fallthru
        _
    $region6: #{tpu_custom_call.1} parent=1 // loop_footer
      %s22 = sadd.s32 1, %s18
    $region7: #{tpu_custom_call.1} parent=1 // loop_footer_branch
      %17 = sbr.rel target = $region3
    $region8: #{tpu_custom_call.1} parent=1 // loop_exit
      _
    %1635 = vsyncpa [#allocation4], 1
    %s1636 = scalar_lea.sflag [#allocation4], 1
    %1637 = vsyncpa %s1636, 1

</llo_original>
